<compile_context>
chip_gen: v7x
topology: tpu7x:2x2x1
jax: 0.10.0
libtpu: 0.0.40
codegen_flags: <defaults>
</compile_context>

<pallas_src>
import functools

import jax
import jax.numpy as jnp
from jax import lax
from jax.experimental import pallas as pl
from jax.experimental.pallas import tpu as pltpu

EPS = 1e-5


# --------------------------------------------------------------------------
# Fused Pallas kernel: BN1+ReLU+1x1 -> BN2+ReLU+3x3 -> BN3+ReLU+1x1 (+skip)
# All activations are (C, N*H*W) lane-dense tiles; single grid step.
# --------------------------------------------------------------------------
def _residual_kernel(x_ref, w1_ref, w2_ref, w3s_ref, pv_ref, m_ref, o_ref,
                     *, N, H, W, Cin, Cmid, Cout):
    L = N * H * W
    f32 = jnp.float32

    # Unpack the single packed per-channel parameter column (static slices).
    off = 0
    g1 = pv_ref[off:off + Cin]; off += Cin
    be1 = pv_ref[off:off + Cin]; off += Cin
    g2 = pv_ref[off:off + Cmid]; off += Cmid
    be2 = pv_ref[off:off + Cmid]; off += Cmid
    g3 = pv_ref[off:off + Cmid]; off += Cmid
    be3 = pv_ref[off:off + Cmid]; off += Cmid
    bfin = pv_ref[off:off + Cout]            # b3 + bs, pre-added host-side

    def bn_relu(t, g, b):
        # training-mode BatchNorm2d: batch mean, biased variance, single pass
        mean = jnp.mean(t, axis=1, keepdims=True)                 # (C, 1)
        msq = jnp.mean(t * t, axis=1, keepdims=True)
        var = msq - mean * mean
        scale = g * lax.rsqrt(var + EPS)
        shift = b - mean * scale
        return jnp.maximum(t * scale + shift, 0.0)

    x = x_ref[...]                                                # (Cin, L)

    # ---- cb.brc1 : BN(Cin)+ReLU + 1x1 (Cin->Cmid); bias cancelled by BN2 --
    t1 = bn_relu(x, g1, be1)
    a1 = jnp.dot(w1_ref[...], t1, preferred_element_type=f32)     # (Cmid, L)

    # ---- cb.brc2 : BN(Cmid)+ReLU + 3x3 SAME; bias cancelled by BN3 --------
    # Taps are lane rolls of the flat (Cmid, N*H*W) tile; per-tap 0/1 masks
    # (host-built) zero every tap that crosses an image edge, which also
    # kills roll wrap-around and cross-image leakage.
    t2 = bn_relu(a1, g2, be2)
    acc = None
    tap = 0
    for dh in (-1, 0, 1):
        for dw in (-1, 0, 1):
            offp = dh * W + dw
            if offp == 0:
                s = t2
            else:
                s = pltpu.roll(t2, (-offp) % L, axis=1) * m_ref[tap:tap + 1, :]
            d = jnp.dot(w2_ref[tap], s, preferred_element_type=f32)
            acc = d if acc is None else acc + d
            tap += 1
    a2 = acc                                                      # (Cmid, L)

    # ---- cb.brc3 (1x1 Cmid->Cout) fused with skip 1x1 (Cin->Cout) + add ---
    t3 = bn_relu(a2, g3, be3)
    out = (jnp.dot(w3s_ref[:, 0:Cmid], t3, preferred_element_type=f32)
           + jnp.dot(w3s_ref[:, Cmid:Cmid + Cin], x, preferred_element_type=f32)
           + bfin)
    o_ref[...] = out.astype(o_ref.dtype)                          # (Cout, L)


# --------------------------------------------------------------------------
# Wrapper: single no-grid pallas_call, whole problem resident in VMEM
# --------------------------------------------------------------------------
def residual_forward(x_nchw, params):
    N, Cin, H, W = x_nchw.shape
    Cmid = params["w1"].shape[0]
    Cout = params["w3"].shape[0]
    L = N * H * W

    # channel-major with batch folded into lanes: (Cin, N*H*W)
    x_cl = jnp.transpose(x_nchw, (1, 0, 2, 3)).reshape(Cin, L)

    # 3x3 weights regrouped per tap: (O,I,3,3) -> (9,O,I), tap = kh*3 + kw
    w2_taps = jnp.transpose(params["w2"], (2, 3, 0, 1)).reshape(9, Cmid, Cmid)

    # brc3 and skip weights side by side; biases pre-added into one vector
    w3s = jnp.concatenate(
        [params["w3"][:, :, 0, 0], params["ws"][:, :, 0, 0]], axis=1)

    # single packed per-channel column: [g1,be1,g2,be2,g3,be3,b3+bs]
    # (b1, b2 are omitted on purpose — exactly cancelled by the next BN)
    pvec = jnp.concatenate([
        params["g1"], params["be1"],
        params["g2"], params["be2"],
        params["g3"], params["be3"],
        params["b3"] + params["bs"],
    ]).reshape(-1, 1).astype(jnp.float32)

    # per-tap 0/1 boundary masks over one image, tiled across the batch
    q = jnp.arange(H * W, dtype=jnp.int32)
    hh, ww = q // W, q % W
    rows = []
    for dh in (-1, 0, 1):
        for dw in (-1, 0, 1):
            ok = ((hh + dh >= 0) & (hh + dh < H) &
                  (ww + dw >= 0) & (ww + dw < W))
            rows.append(ok)
    masks = jnp.tile(jnp.stack(rows).astype(jnp.float32), (1, N))   # (9, L)

    vmem = lambda: pl.BlockSpec(memory_space=pltpu.MemorySpace.VMEM)
    kernel = functools.partial(_residual_kernel, N=N, H=H, W=W,
                               Cin=Cin, Cmid=Cmid, Cout=Cout)

    out_flat = pl.pallas_call(
        kernel,
        out_shape=jax.ShapeDtypeStruct((Cout, L), jnp.float32),
        in_specs=[vmem() for _ in range(6)],
        out_specs=vmem(),
    )(x_cl, params["w1"][:, :, 0, 0], w2_taps, w3s, pvec, masks)

    # layout plumbing back to NCHW (tiny; done by XLA outside the kernel)
    return jnp.transpose(out_flat.reshape(Cout, N, H, W), (1, 0, 2, 3))


# --------------------------------------------------------------------------
# Parameters (PyTorch OIHW layout) + pure-JAX reference for verification
# --------------------------------------------------------------------------
def make_params(key, cin, cout):
    cmid = cout // 2
    ks = jax.random.split(key, 14)

    def w(k, co, ci, kh, kw):
        return jax.random.normal(k, (co, ci, kh, kw), jnp.float32) * 0.1

    def v(k, c, loc=0.0):
        return loc + jax.random.normal(k, (c,), jnp.float32) * 0.1

    return {
        "g1": v(ks[0], cin, 1.0), "be1": v(ks[1], cin),
        "w1": w(ks[2], cmid, cin, 1, 1), "b1": v(ks[3], cmid),
        "g2": v(ks[4], cmid, 1.0), "be2": v(ks[5], cmid),
        "w2": w(ks[6], cmid, cmid, 3, 3), "b2": v(ks[7], cmid),
        "g3": v(ks[8], cmid, 1.0), "be3": v(ks[9], cmid),
        "w3": w(ks[10], cout, cmid, 1, 1), "b3": v(ks[11], cout),
        "ws": w(ks[12], cout, cin, 1, 1), "bs": v(ks[13], cout),
    }


def residual_reference(x, p):
    def bn_relu(t, g, b):
        mean = jnp.mean(t, axis=(0, 2, 3), keepdims=True)
        var = jnp.mean(jnp.square(t - mean), axis=(0, 2, 3), keepdims=True)
        t = (t - mean) * lax.rsqrt(var + EPS)
        return jax.nn.relu(t * g.reshape(1, -1, 1, 1) + b.reshape(1, -1, 1, 1))

    def conv(t, w, b, pad):
        y = lax.conv_general_dilated(
            t, w, window_strides=(1, 1), padding=((pad, pad), (pad, pad)),
            dimension_numbers=("NCHW", "OIHW", "NCHW"),
            precision=lax.Precision.HIGHEST)
        return y + b.reshape(1, -1, 1, 1)

    a = conv(bn_relu(x, p["g1"], p["be1"]), p["w1"], p["b1"], 0)
    a = conv(bn_relu(a, p["g2"], p["be2"]), p["w2"], p["b2"], 1)
    a = conv(bn_relu(a, p["g3"], p["be3"]), p["w3"], p["b3"], 0)
    return a + conv(x, p["ws"], p["bs"], 0)


if __name__ == "__main__":
    key = jax.random.PRNGKey(0)
    kx, kp = jax.random.split(key)
    N, Cin, H, W = 2, 4, 16, 16
    Cout = 8
    x = jax.random.normal(kx, (N, Cin, H, W), jnp.float32)
    params = make_params(kp, Cin, Cout)

    fwd = jax.jit(residual_forward)
    out = fwd(x, params)
    jax.block_until_ready(out)
    assert out.shape == (N, Cout, H, W), out.shape
    assert bool(jnp.all(jnp.isfinite(out)))

    # correctness check vs a pure-JAX reference (the reference still applies
    # b1/b2 — the kernel omits them because training-mode BN cancels them)
    ref = residual_reference(x, params)
    err = float(jnp.max(jnp.abs(out - ref)))
    assert err < 1e-2, f"mismatch vs reference: max abs err = {err}"

    print("KERNEL_OK")
</pallas_src>

<mosaic_0001>
module attributes {stable_mosaic.version = 11 : i64} {
  func.func @_residual_kernel(%arg0: memref<4x512xf32, #tpu.memory_space<vmem>>, %arg1: memref<4x4xf32, #tpu.memory_space<vmem>>, %arg2: memref<9x4x4xf32, #tpu.memory_space<vmem>>, %arg3: memref<8x8xf32, #tpu.memory_space<vmem>>, %arg4: memref<32x1xf32, #tpu.memory_space<vmem>>, %arg5: memref<9x512xf32, #tpu.memory_space<vmem>>, %arg6: memref<8x512xf32, #tpu.memory_space<vmem>>) attributes {dimension_semantics = [], scalar_prefetch = 0 : i64, scratch_operands = 0 : i64, tpu.core_type = #tpu.core_type<tc>} {
    %c0 = arith.constant 0 : index
    %c0_0 = arith.constant 0 : index
    %0 = vector.load %arg4[%c0, %c0_0] : memref<32x1xf32, #tpu.memory_space<vmem>>, vector<4x1xf32>
    %c4 = arith.constant 4 : index
    %c0_1 = arith.constant 0 : index
    %1 = vector.load %arg4[%c4, %c0_1] : memref<32x1xf32, #tpu.memory_space<vmem>>, vector<4x1xf32>
    %c8 = arith.constant 8 : index
    %c0_2 = arith.constant 0 : index
    %2 = vector.load %arg4[%c8, %c0_2] : memref<32x1xf32, #tpu.memory_space<vmem>>, vector<4x1xf32>
    %c12 = arith.constant 12 : index
    %c0_3 = arith.constant 0 : index
    %3 = vector.load %arg4[%c12, %c0_3] : memref<32x1xf32, #tpu.memory_space<vmem>>, vector<4x1xf32>
    %c16 = arith.constant 16 : index
    %c0_4 = arith.constant 0 : index
    %4 = vector.load %arg4[%c16, %c0_4] : memref<32x1xf32, #tpu.memory_space<vmem>>, vector<4x1xf32>
    %c20 = arith.constant 20 : index
    %c0_5 = arith.constant 0 : index
    %5 = vector.load %arg4[%c20, %c0_5] : memref<32x1xf32, #tpu.memory_space<vmem>>, vector<4x1xf32>
    %c24 = arith.constant 24 : index
    %c0_6 = arith.constant 0 : index
    %6 = vector.load %arg4[%c24, %c0_6] : memref<32x1xf32, #tpu.memory_space<vmem>>, vector<8x1xf32>
    %c0_7 = arith.constant 0 : index
    %c0_8 = arith.constant 0 : index
    %7 = vector.load %arg0[%c0_7, %c0_8] : memref<4x512xf32, #tpu.memory_space<vmem>>, vector<4x512xf32>
    %cst = arith.constant dense<0.000000e+00> : vector<4xf32>
    %8 = vector.multi_reduction <add>, %7, %cst [1] : vector<4x512xf32> to vector<4xf32>
    %9 = vector.shape_cast %8 : vector<4xf32> to vector<4x1xf32>
    %cst_9 = arith.constant 5.120000e+02 : f32
    %10 = vector.broadcast %cst_9 : f32 to vector<4x1xf32>
    %11 = arith.divf %9, %10 : vector<4x1xf32>
    %12 = arith.mulf %7, %7 : vector<4x512xf32>
    %cst_10 = arith.constant dense<0.000000e+00> : vector<4xf32>
    %13 = vector.multi_reduction <add>, %12, %cst_10 [1] : vector<4x512xf32> to vector<4xf32>
    %14 = vector.shape_cast %13 : vector<4xf32> to vector<4x1xf32>
    %cst_11 = arith.constant 5.120000e+02 : f32
    %15 = vector.broadcast %cst_11 : f32 to vector<4x1xf32>
    %16 = arith.divf %14, %15 : vector<4x1xf32>
    %17 = arith.mulf %11, %11 : vector<4x1xf32>
    %18 = arith.subf %16, %17 : vector<4x1xf32>
    %cst_12 = arith.constant 9.99999974E-6 : f32
    %19 = vector.broadcast %cst_12 : f32 to vector<4x1xf32>
    %20 = arith.addf %18, %19 : vector<4x1xf32>
    %21 = math.rsqrt %20 : vector<4x1xf32>
    %22 = arith.mulf %0, %21 : vector<4x1xf32>
    %23 = arith.mulf %11, %22 : vector<4x1xf32>
    %24 = arith.subf %1, %23 : vector<4x1xf32>
    %25 = vector.broadcast %22 : vector<4x1xf32> to vector<4x512xf32>
    %26 = arith.mulf %7, %25 : vector<4x512xf32>
    %27 = vector.broadcast %24 : vector<4x1xf32> to vector<4x512xf32>
    %28 = arith.addf %26, %27 : vector<4x512xf32>
    %cst_13 = arith.constant 0.000000e+00 : f32
    %29 = vector.broadcast %cst_13 : f32 to vector<4x512xf32>
    %30 = arith.maximumf %28, %29 : vector<4x512xf32>
    %c0_14 = arith.constant 0 : index
    %c0_15 = arith.constant 0 : index
    %31 = vector.load %arg1[%c0_14, %c0_15] : memref<4x4xf32, #tpu.memory_space<vmem>>, vector<4x4xf32>
    %cst_16 = arith.constant dense<0.000000e+00> : vector<4x512xf32>
    %32 = tpu.matmul %31, %30, %cst_16 {dimension_numbers = #tpu.dot_dimension_numbers<[1], [0], [0], [1], [0, 0, 1, 1], [], []>} : vector<4x4xf32>, vector<4x512xf32>, vector<4x512xf32> -> vector<4x512xf32>
    %cst_17 = arith.constant dense<0.000000e+00> : vector<4xf32>
    %33 = vector.multi_reduction <add>, %32, %cst_17 [1] : vector<4x512xf32> to vector<4xf32>
    %34 = vector.shape_cast %33 : vector<4xf32> to vector<4x1xf32>
    %cst_18 = arith.constant 5.120000e+02 : f32
    %35 = vector.broadcast %cst_18 : f32 to vector<4x1xf32>
    %36 = arith.divf %34, %35 : vector<4x1xf32>
    %37 = arith.mulf %32, %32 : vector<4x512xf32>
    %cst_19 = arith.constant dense<0.000000e+00> : vector<4xf32>
    %38 = vector.multi_reduction <add>, %37, %cst_19 [1] : vector<4x512xf32> to vector<4xf32>
    %39 = vector.shape_cast %38 : vector<4xf32> to vector<4x1xf32>
    %cst_20 = arith.constant 5.120000e+02 : f32
    %40 = vector.broadcast %cst_20 : f32 to vector<4x1xf32>
    %41 = arith.divf %39, %40 : vector<4x1xf32>
    %42 = arith.mulf %36, %36 : vector<4x1xf32>
    %43 = arith.subf %41, %42 : vector<4x1xf32>
    %cst_21 = arith.constant 9.99999974E-6 : f32
    %44 = vector.broadcast %cst_21 : f32 to vector<4x1xf32>
    %45 = arith.addf %43, %44 : vector<4x1xf32>
    %46 = math.rsqrt %45 : vector<4x1xf32>
    %47 = arith.mulf %2, %46 : vector<4x1xf32>
    %48 = arith.mulf %36, %47 : vector<4x1xf32>
    %49 = arith.subf %3, %48 : vector<4x1xf32>
    %50 = vector.broadcast %47 : vector<4x1xf32> to vector<4x512xf32>
    %51 = arith.mulf %32, %50 : vector<4x512xf32>
    %52 = vector.broadcast %49 : vector<4x1xf32> to vector<4x512xf32>
    %53 = arith.addf %51, %52 : vector<4x512xf32>
    %cst_22 = arith.constant 0.000000e+00 : f32
    %54 = vector.broadcast %cst_22 : f32 to vector<4x512xf32>
    %55 = arith.maximumf %53, %54 : vector<4x512xf32>
    %c17_i32 = arith.constant 17 : i32
    %56 = tpu.dynamic_rotate %55 by %c17_i32 dim 1 : vector<4x512xf32>, i32 -> vector<4x512xf32>
    %c0_23 = arith.constant 0 : index
    %c0_24 = arith.constant 0 : index
    %57 = vector.load %arg5[%c0_23, %c0_24] : memref<9x512xf32, #tpu.memory_space<vmem>>, vector<1x512xf32>
    %58 = vector.broadcast %57 : vector<1x512xf32> to vector<4x512xf32>
    %59 = arith.mulf %56, %58 : vector<4x512xf32>
    %c0_25 = arith.constant 0 : index
    %c0_26 = arith.constant 0 : index
    %c0_27 = arith.constant 0 : index
    %60 = vector.load %arg2[%c0_25, %c0_26, %c0_27] : memref<9x4x4xf32, #tpu.memory_space<vmem>>, vector<1x4x4xf32>
    %61 = vector.shape_cast %60 : vector<1x4x4xf32> to vector<4x4xf32>
    %cst_28 = arith.constant dense<0.000000e+00> : vector<4x512xf32>
    %62 = tpu.matmul %61, %59, %cst_28 {dimension_numbers = #tpu.dot_dimension_numbers<[1], [0], [0], [1], [0, 0, 1, 1], [], []>} : vector<4x4xf32>, vector<4x512xf32>, vector<4x512xf32> -> vector<4x512xf32>
    %c16_i32 = arith.constant 16 : i32
    %63 = tpu.dynamic_rotate %55 by %c16_i32 dim 1 : vector<4x512xf32>, i32 -> vector<4x512xf32>
    %c1 = arith.constant 1 : index
    %c0_29 = arith.constant 0 : index
    %64 = vector.load %arg5[%c1, %c0_29] : memref<9x512xf32, #tpu.memory_space<vmem>>, vector<1x512xf32>
    %65 = vector.broadcast %64 : vector<1x512xf32> to vector<4x512xf32>
    %66 = arith.mulf %63, %65 : vector<4x512xf32>
    %c1_30 = arith.constant 1 : index
    %c0_31 = arith.constant 0 : index
    %c0_32 = arith.constant 0 : index
    %67 = vector.load %arg2[%c1_30, %c0_31, %c0_32] : memref<9x4x4xf32, #tpu.memory_space<vmem>>, vector<1x4x4xf32>
    %68 = vector.shape_cast %67 : vector<1x4x4xf32> to vector<4x4xf32>
    %cst_33 = arith.constant dense<0.000000e+00> : vector<4x512xf32>
    %69 = tpu.matmul %68, %66, %cst_33 {dimension_numbers = #tpu.dot_dimension_numbers<[1], [0], [0], [1], [0, 0, 1, 1], [], []>} : vector<4x4xf32>, vector<4x512xf32>, vector<4x512xf32> -> vector<4x512xf32>
    %70 = arith.addf %62, %69 : vector<4x512xf32>
    %c15_i32 = arith.constant 15 : i32
    %71 = tpu.dynamic_rotate %55 by %c15_i32 dim 1 : vector<4x512xf32>, i32 -> vector<4x512xf32>
    %c2 = arith.constant 2 : index
    %c0_34 = arith.constant 0 : index
    %72 = vector.load %arg5[%c2, %c0_34] : memref<9x512xf32, #tpu.memory_space<vmem>>, vector<1x512xf32>
    %73 = vector.broadcast %72 : vector<1x512xf32> to vector<4x512xf32>
    %74 = arith.mulf %71, %73 : vector<4x512xf32>
    %c2_35 = arith.constant 2 : index
    %c0_36 = arith.constant 0 : index
    %c0_37 = arith.constant 0 : index
    %75 = vector.load %arg2[%c2_35, %c0_36, %c0_37] : memref<9x4x4xf32, #tpu.memory_space<vmem>>, vector<1x4x4xf32>
    %76 = vector.shape_cast %75 : vector<1x4x4xf32> to vector<4x4xf32>
    %cst_38 = arith.constant dense<0.000000e+00> : vector<4x512xf32>
    %77 = tpu.matmul %76, %74, %cst_38 {dimension_numbers = #tpu.dot_dimension_numbers<[1], [0], [0], [1], [0, 0, 1, 1], [], []>} : vector<4x4xf32>, vector<4x512xf32>, vector<4x512xf32> -> vector<4x512xf32>
    %78 = arith.addf %70, %77 : vector<4x512xf32>
    %c1_i32 = arith.constant 1 : i32
    %79 = tpu.dynamic_rotate %55 by %c1_i32 dim 1 : vector<4x512xf32>, i32 -> vector<4x512xf32>
    %c3 = arith.constant 3 : index
    %c0_39 = arith.constant 0 : index
    %80 = vector.load %arg5[%c3, %c0_39] : memref<9x512xf32, #tpu.memory_space<vmem>>, vector<1x512xf32>
    %81 = vector.broadcast %80 : vector<1x512xf32> to vector<4x512xf32>
    %82 = arith.mulf %79, %81 : vector<4x512xf32>
    %c3_40 = arith.constant 3 : index
    %c0_41 = arith.constant 0 : index
    %c0_42 = arith.constant 0 : index
    %83 = vector.load %arg2[%c3_40, %c0_41, %c0_42] : memref<9x4x4xf32, #tpu.memory_space<vmem>>, vector<1x4x4xf32>
    %84 = vector.shape_cast %83 : vector<1x4x4xf32> to vector<4x4xf32>
    %cst_43 = arith.constant dense<0.000000e+00> : vector<4x512xf32>
    %85 = tpu.matmul %84, %82, %cst_43 {dimension_numbers = #tpu.dot_dimension_numbers<[1], [0], [0], [1], [0, 0, 1, 1], [], []>} : vector<4x4xf32>, vector<4x512xf32>, vector<4x512xf32> -> vector<4x512xf32>
    %86 = arith.addf %78, %85 : vector<4x512xf32>
    %c4_44 = arith.constant 4 : index
    %c0_45 = arith.constant 0 : index
    %c0_46 = arith.constant 0 : index
    %87 = vector.load %arg2[%c4_44, %c0_45, %c0_46] : memref<9x4x4xf32, #tpu.memory_space<vmem>>, vector<1x4x4xf32>
    %88 = vector.shape_cast %87 : vector<1x4x4xf32> to vector<4x4xf32>
    %cst_47 = arith.constant dense<0.000000e+00> : vector<4x512xf32>
    %89 = tpu.matmul %88, %55, %cst_47 {dimension_numbers = #tpu.dot_dimension_numbers<[1], [0], [0], [1], [0, 0, 1, 1], [], []>} : vector<4x4xf32>, vector<4x512xf32>, vector<4x512xf32> -> vector<4x512xf32>
    %90 = arith.addf %86, %89 : vector<4x512xf32>
    %c511_i32 = arith.constant 511 : i32
    %91 = tpu.dynamic_rotate %55 by %c511_i32 dim 1 : vector<4x512xf32>, i32 -> vector<4x512xf32>
    %c5 = arith.constant 5 : index
    %c0_48 = arith.constant 0 : index
    %92 = vector.load %arg5[%c5, %c0_48] : memref<9x512xf32, #tpu.memory_space<vmem>>, vector<1x512xf32>
    %93 = vector.broadcast %92 : vector<1x512xf32> to vector<4x512xf32>
    %94 = arith.mulf %91, %93 : vector<4x512xf32>
    %c5_49 = arith.constant 5 : index
    %c0_50 = arith.constant 0 : index
    %c0_51 = arith.constant 0 : index
    %95 = vector.load %arg2[%c5_49, %c0_50, %c0_51] : memref<9x4x4xf32, #tpu.memory_space<vmem>>, vector<1x4x4xf32>
    %96 = vector.shape_cast %95 : vector<1x4x4xf32> to vector<4x4xf32>
    %cst_52 = arith.constant dense<0.000000e+00> : vector<4x512xf32>
    %97 = tpu.matmul %96, %94, %cst_52 {dimension_numbers = #tpu.dot_dimension_numbers<[1], [0], [0], [1], [0, 0, 1, 1], [], []>} : vector<4x4xf32>, vector<4x512xf32>, vector<4x512xf32> -> vector<4x512xf32>
    %98 = arith.addf %90, %97 : vector<4x512xf32>
    %c497_i32 = arith.constant 497 : i32
    %99 = tpu.dynamic_rotate %55 by %c497_i32 dim 1 : vector<4x512xf32>, i32 -> vector<4x512xf32>
    %c6 = arith.constant 6 : index
    %c0_53 = arith.constant 0 : index
    %100 = vector.load %arg5[%c6, %c0_53] : memref<9x512xf32, #tpu.memory_space<vmem>>, vector<1x512xf32>
    %101 = vector.broadcast %100 : vector<1x512xf32> to vector<4x512xf32>
    %102 = arith.mulf %99, %101 : vector<4x512xf32>
    %c6_54 = arith.constant 6 : index
    %c0_55 = arith.constant 0 : index
    %c0_56 = arith.constant 0 : index
    %103 = vector.load %arg2[%c6_54, %c0_55, %c0_56] : memref<9x4x4xf32, #tpu.memory_space<vmem>>, vector<1x4x4xf32>
    %104 = vector.shape_cast %103 : vector<1x4x4xf32> to vector<4x4xf32>
    %cst_57 = arith.constant dense<0.000000e+00> : vector<4x512xf32>
    %105 = tpu.matmul %104, %102, %cst_57 {dimension_numbers = #tpu.dot_dimension_numbers<[1], [0], [0], [1], [0, 0, 1, 1], [], []>} : vector<4x4xf32>, vector<4x512xf32>, vector<4x512xf32> -> vector<4x512xf32>
    %106 = arith.addf %98, %105 : vector<4x512xf32>
    %c496_i32 = arith.constant 496 : i32
    %107 = tpu.dynamic_rotate %55 by %c496_i32 dim 1 : vector<4x512xf32>, i32 -> vector<4x512xf32>
    %c7 = arith.constant 7 : index
    %c0_58 = arith.constant 0 : index
    %108 = vector.load %arg5[%c7, %c0_58] : memref<9x512xf32, #tpu.memory_space<vmem>>, vector<1x512xf32>
    %109 = vector.broadcast %108 : vector<1x512xf32> to vector<4x512xf32>
    %110 = arith.mulf %107, %109 : vector<4x512xf32>
    %c7_59 = arith.constant 7 : index
    %c0_60 = arith.constant 0 : index
    %c0_61 = arith.constant 0 : index
    %111 = vector.load %arg2[%c7_59, %c0_60, %c0_61] : memref<9x4x4xf32, #tpu.memory_space<vmem>>, vector<1x4x4xf32>
    %112 = vector.shape_cast %111 : vector<1x4x4xf32> to vector<4x4xf32>
    %cst_62 = arith.constant dense<0.000000e+00> : vector<4x512xf32>
    %113 = tpu.matmul %112, %110, %cst_62 {dimension_numbers = #tpu.dot_dimension_numbers<[1], [0], [0], [1], [0, 0, 1, 1], [], []>} : vector<4x4xf32>, vector<4x512xf32>, vector<4x512xf32> -> vector<4x512xf32>
    %114 = arith.addf %106, %113 : vector<4x512xf32>
    %c495_i32 = arith.constant 495 : i32
    %115 = tpu.dynamic_rotate %55 by %c495_i32 dim 1 : vector<4x512xf32>, i32 -> vector<4x512xf32>
    %c8_63 = arith.constant 8 : index
    %c0_64 = arith.constant 0 : index
    %116 = vector.load %arg5[%c8_63, %c0_64] : memref<9x512xf32, #tpu.memory_space<vmem>>, vector<1x512xf32>
    %117 = vector.broadcast %116 : vector<1x512xf32> to vector<4x512xf32>
    %118 = arith.mulf %115, %117 : vector<4x512xf32>
    %c8_65 = arith.constant 8 : index
    %c0_66 = arith.constant 0 : index
    %c0_67 = arith.constant 0 : index
    %119 = vector.load %arg2[%c8_65, %c0_66, %c0_67] : memref<9x4x4xf32, #tpu.memory_space<vmem>>, vector<1x4x4xf32>
    %120 = vector.shape_cast %119 : vector<1x4x4xf32> to vector<4x4xf32>
    %cst_68 = arith.constant dense<0.000000e+00> : vector<4x512xf32>
    %121 = tpu.matmul %120, %118, %cst_68 {dimension_numbers = #tpu.dot_dimension_numbers<[1], [0], [0], [1], [0, 0, 1, 1], [], []>} : vector<4x4xf32>, vector<4x512xf32>, vector<4x512xf32> -> vector<4x512xf32>
    %122 = arith.addf %114, %121 : vector<4x512xf32>
    %cst_69 = arith.constant dense<0.000000e+00> : vector<4xf32>
    %123 = vector.multi_reduction <add>, %122, %cst_69 [1] : vector<4x512xf32> to vector<4xf32>
    %124 = vector.shape_cast %123 : vector<4xf32> to vector<4x1xf32>
    %cst_70 = arith.constant 5.120000e+02 : f32
    %125 = vector.broadcast %cst_70 : f32 to vector<4x1xf32>
    %126 = arith.divf %124, %125 : vector<4x1xf32>
    %127 = arith.mulf %122, %122 : vector<4x512xf32>
    %cst_71 = arith.constant dense<0.000000e+00> : vector<4xf32>
    %128 = vector.multi_reduction <add>, %127, %cst_71 [1] : vector<4x512xf32> to vector<4xf32>
    %129 = vector.shape_cast %128 : vector<4xf32> to vector<4x1xf32>
    %cst_72 = arith.constant 5.120000e+02 : f32
    %130 = vector.broadcast %cst_72 : f32 to vector<4x1xf32>
    %131 = arith.divf %129, %130 : vector<4x1xf32>
    %132 = arith.mulf %126, %126 : vector<4x1xf32>
    %133 = arith.subf %131, %132 : vector<4x1xf32>
    %cst_73 = arith.constant 9.99999974E-6 : f32
    %134 = vector.broadcast %cst_73 : f32 to vector<4x1xf32>
    %135 = arith.addf %133, %134 : vector<4x1xf32>
    %136 = math.rsqrt %135 : vector<4x1xf32>
    %137 = arith.mulf %4, %136 : vector<4x1xf32>
    %138 = arith.mulf %126, %137 : vector<4x1xf32>
    %139 = arith.subf %5, %138 : vector<4x1xf32>
    %140 = vector.broadcast %137 : vector<4x1xf32> to vector<4x512xf32>
    %141 = arith.mulf %122, %140 : vector<4x512xf32>
    %142 = vector.broadcast %139 : vector<4x1xf32> to vector<4x512xf32>
    %143 = arith.addf %141, %142 : vector<4x512xf32>
    %cst_74 = arith.constant 0.000000e+00 : f32
    %144 = vector.broadcast %cst_74 : f32 to vector<4x512xf32>
    %145 = arith.maximumf %143, %144 : vector<4x512xf32>
    %c0_75 = arith.constant 0 : index
    %c0_76 = arith.constant 0 : index
    %146 = vector.load %arg3[%c0_75, %c0_76] : memref<8x8xf32, #tpu.memory_space<vmem>>, vector<8x4xf32>
    %cst_77 = arith.constant dense<0.000000e+00> : vector<8x512xf32>
    %147 = tpu.matmul %146, %145, %cst_77 {dimension_numbers = #tpu.dot_dimension_numbers<[1], [0], [0], [1], [0, 0, 1, 1], [], []>} : vector<8x4xf32>, vector<4x512xf32>, vector<8x512xf32> -> vector<8x512xf32>
    %c0_78 = arith.constant 0 : index
    %c4_79 = arith.constant 4 : index
    %148 = vector.load %arg3[%c0_78, %c4_79] : memref<8x8xf32, #tpu.memory_space<vmem>>, vector<8x4xf32>
    %cst_80 = arith.constant dense<0.000000e+00> : vector<8x512xf32>
    %149 = tpu.matmul %148, %7, %cst_80 {dimension_numbers = #tpu.dot_dimension_numbers<[1], [0], [0], [1], [0, 0, 1, 1], [], []>} : vector<8x4xf32>, vector<4x512xf32>, vector<8x512xf32> -> vector<8x512xf32>
    %150 = arith.addf %147, %149 : vector<8x512xf32>
    %151 = vector.broadcast %6 : vector<8x1xf32> to vector<8x512xf32>
    %152 = arith.addf %150, %151 : vector<8x512xf32>
    %c0_81 = arith.constant 0 : index
    %c0_82 = arith.constant 0 : index
    %153 = vector.load %arg6[%c0_81, %c0_82] : memref<8x512xf32, #tpu.memory_space<vmem>>, vector<8x512xf32>
    tpu.vector_store %arg6[%c0_81, %c0_82], %152 {strides = array<i32>} : memref<8x512xf32, #tpu.memory_space<vmem>>, vector<8x512xf32>,
    return
  }
}

</mosaic_0001>

<llo_original>
// kernel: residual_forward.1
$region0: #{residual_forward.1}
  #allocation0 [shape = 'u32[]', space=smem, size = 0x4, offset = 0x4, fixed_abs, tag = 'smem constant byte address 0x4 - core index']
  #allocation1 [shape = 'u32[144,128]{1,0:T(1,128)}', space=vmem, size = 0x12000, scoped, tag = 'internal scratch']
  %s0 = inlined_call_operand.vmem [shape: f32[4,512], index: 0, kind: input, shape index: {}]
  %s1 = inlined_call_operand.vmem [shape: f32[4,4], index: 1, kind: input, shape index: {}]
  %s2 = inlined_call_operand.vmem [shape: f32[9,4,4], index: 2, kind: input, shape index: {}]
  %s3 = inlined_call_operand.vmem [shape: f32[8,8], index: 3, kind: input, shape index: {}]
  %s4 = inlined_call_operand.vmem [shape: f32[32,1], index: 4, kind: input, shape index: {}]
  %s5 = inlined_call_operand.vmem [shape: f32[9,512], index: 5, kind: input, shape index: {}]
  %s6 = inlined_call_operand.vmem [shape: f32[8,512], index: 6, kind: output, shape index: {}]
  %s7 = sld [smem:[#allocation0]]
  $region34: #{residual_forward.1} parent=0
    _
  %s9 = ssub.s32 1, %s7
  %s10 = scalar_select 0, %s9, %s7
  // Predicated region
  $region2: #{residual_forward.1} parent=0 // pred_check
    _
  $region3: #{residual_forward.1} parent=0 // pred_check_branch
    %12 = sbr.rel (0) target = $region5
  $region4: #{residual_forward.1} parent=0 // pred_region
    _
  $region5: #{residual_forward.1} parent=0 // pred_fallthru
    _
  // Predicated region
  $region6: #{residual_forward.1} parent=0 // pred_check
    _
  $region7: #{residual_forward.1} parent=0 // pred_check_branch
    %14 = sbr.rel (0) target = $region9
  $region8: #{residual_forward.1} parent=0 // pred_region
    _
  $region9: #{residual_forward.1} parent=0 // pred_fallthru
    _
  // Predicated region
  $region10: #{residual_forward.1} parent=0 // pred_check
    _
  $region11: #{residual_forward.1} parent=0 // pred_check_branch
    %16 = sbr.rel (0) target = $region13
  $region12: #{residual_forward.1} parent=0 // pred_region
    _
  $region13: #{residual_forward.1} parent=0 // pred_fallthru
    _
  // Predicated region
  $region14: #{residual_forward.1} parent=0 // pred_check
    _
  $region15: #{residual_forward.1} parent=0 // pred_check_branch
    %18 = sbr.rel (0) target = $region17
  $region16: #{residual_forward.1} parent=0 // pred_region
    _
  $region17: #{residual_forward.1} parent=0 // pred_fallthru
    _
  // Predicated region
  $region18: #{residual_forward.1} parent=0 // pred_check
    _
  $region19: #{residual_forward.1} parent=0 // pred_check_branch
    %20 = sbr.rel (0) target = $region21
  $region20: #{residual_forward.1} parent=0 // pred_region
    _
  $region21: #{residual_forward.1} parent=0 // pred_fallthru
    _
  // Predicated region
  $region22: #{residual_forward.1} parent=0 // pred_check
    _
  $region23: #{residual_forward.1} parent=0 // pred_check_branch
    %22 = sbr.rel (0) target = $region25
  $region24: #{residual_forward.1} parent=0 // pred_region
    _
  $region25: #{residual_forward.1} parent=0 // pred_fallthru
    _
  %v23 = vld [vmem:[%s4] sm:$0xf]
  %v24 = vld [vmem:[%s4 + $0x4] sm:$0xf]
  %v25 = vld [vmem:[%s4 + $0x8] sm:$0xf]
  %v26 = vld [vmem:[%s4 + $0xc] sm:$0xf]
  %v27 = vld [vmem:[%s4 + $0x10] sm:$0xf]
  %v28 = vld [vmem:[%s4 + $0x14] sm:$0xf]
  %v29 = vld [vmem:[%s4 + $0x18] sm:$0xff]
  %v30 = vld [vmem:[%s0] sm:$0xff]
  %v31 = vld [vmem:[%s0 + $0x8] sm:$0xff]
  %v34 = vcombine.high %v30, %v30
  %v35 = vcombine.high %v31, %v31
  %vm38 = vcmask 1043456
  %v39 = vsel %vm38, %v30, 0.0
  %v40 = vsel %vm38, %v34, 0.0
  %v41 = vadd.f32 %v39, %v40
  %v42 = vsel %vm38, %v31, 0.0
  %v43 = vadd.f32 %v41, %v42
  %v44 = vsel %vm38, %v35, 0.0
  %v45 = vadd.f32 %v43, %v44
  %46 = vadd.xlane.f32.xlu0 %v45
  %v47 = vpop.xlane.xlu0 %46
  %v48 = vrcp.pop 512.0
  %v49 = vmul.f32 %v47, %v48
  %v50 = vmul.f32 %v30, %v30
  %v51 = vmul.f32 %v31, %v31
  %v54 = vcombine.high %v50, %v50
  %v55 = vcombine.high %v51, %v51
  %v58 = vsel %vm38, %v50, 0.0
  %v59 = vsel %vm38, %v54, 0.0
  %v60 = vadd.f32 %v58, %v59
  %v61 = vsel %vm38, %v51, 0.0
  %v62 = vadd.f32 %v60, %v61
  %v63 = vsel %vm38, %v55, 0.0
  %v64 = vadd.f32 %v62, %v63
  %65 = vadd.xlane.f32.xlu0 %v64
  %v66 = vpop.xlane.xlu0 %65
  %v67 = vmul.f32 %v66, %v48
  %v68 = vmul.f32 %v49, %v49
  %v69 = vsub.f32 %v67, %v68
  %v70 = vadd.f32 %v69, 1e-05
  %v71 = vrsqrt.pop %v70
  %v72 = vmul.f32 %v23, %v71
  %v73 = vmul.f32 %v49, %v72
  %v74 = vsub.f32 %v24, %v73
  %76 = vset.pattern.permute.xlu0 0
  %77 = vperm.xlu0 %76, %v72
  %v78 = vpop.permute.xlu0 %77
  %v80 = vunpack.c.l.s4 839922192
  %v81 = vunpack.c.0.s8 %v80
  %v82 = vlaneseq
  %v83 = vshrl.u32 %v82, 7
  %v84 = vsub.s32 %v81, %v83
  %v85 = vrot.slane %v78, %v84
  %v87 = vmul.f32 %v30, %v85
  %v88 = vmul.f32 %v31, %v85
  %90 = vset.pattern.permute.xlu0 0
  %91 = vperm.xlu0 %90, %v74
  %v92 = vpop.permute.xlu0 %91
  %v94 = vunpack.c.l.s4 839922192
  %v95 = vunpack.c.0.s8 %v94
  %v96 = vlaneseq
  %v97 = vshrl.u32 %v96, 7
  %v98 = vsub.s32 %v95, %v97
  %v99 = vrot.slane %v92, %v98
  %v101 = vadd.f32 %v87, %v99
  %v102 = vadd.f32 %v88, %v99
  %v103 = vmax.f32 %v101, 0.0
  %v104 = vmax.f32 %v102, 0.0
  %v105 = vld [vmem:[%s1] sm:$0xf]
  %v108 = vcombine.high %v103, %v103
  %v109 = vcombine.high %v104, %v104
  %vm110 = vcmask 31744
  %v112 = vsel %vm110, %v105, 0
  %v114 = vsel %vm38, %v103, 0
  %v116 = vsel %vm38, %v108, 0
  %v118 = vsel %vm38, %v104, 0
  %v120 = vsel %vm38, %v109, 0
  %122 = vmatprep.subr.mxu0 %v116
  %123 = vmatpush1.msra.mxu0 %v114
  %124 = vmatprep.subr.mxu0 0.0
  %125 = vmatpush1.msra.mxu0 0.0
  %126 = vmatprep.subr.mxu0 0.0
  %127 = vmatpush1.msra.mxu0 0.0
  %128 = vmatprep.subr.mxu0 0.0
  %129 = vmatpush1.msra.mxu0 0.0
  %130 = vmatprep.subr.mxu0 0.0
  %131 = vmatpush1.msra.mxu0 0.0
  %132 = vmatprep.subr.mxu0 0.0
  %133 = vmatpush1.msra.mxu0 0.0
  %134 = vmatprep.subr.mxu0 0.0
  %135 = vmatpush1.msra.mxu0 0.0
  %136 = vmatprep.subr.mxu0 0.0
  %137 = vmatpush1.msra.mxu0 0.0
  %138 = vmatprep.subr.mxu0 0.0
  %139 = vmatpush1.msra.mxu0 0.0
  %140 = vmatprep.subr.mxu0 0.0
  %141 = vmatpush1.msra.mxu0 0.0
  %142 = vmatprep.subr.mxu0 0.0
  %143 = vmatpush1.msra.mxu0 0.0
  %144 = vmatprep.subr.mxu0 0.0
  %145 = vmatpush1.msra.mxu0 0.0
  %146 = vmatprep.subr.mxu0 0.0
  %147 = vmatpush1.msra.mxu0 0.0
  %148 = vmatprep.subr.mxu0 0.0
  %149 = vmatpush1.msra.mxu0 0.0
  %150 = vmatprep.subr.mxu0 0.0
  %151 = vmatpush1.msra.mxu0 0.0
  %152 = vmatprep.subr.mxu0 0.0
  %153 = vmatpush1.msra.mxu0 0.0
  %154 = vmatprep.subr.mxu0 0.0
  %155 = vmatpush1.msra.mxu0 0.0
  %156 = vmatprep.subr.mxu0 0.0
  %157 = vmatpush1.msra.mxu0 0.0
  %158 = vmatprep.subr.mxu0 0.0
  %159 = vmatpush1.msra.mxu0 0.0
  %160 = vmatprep.subr.mxu0 0.0
  %161 = vmatpush1.msra.mxu0 0.0
  %162 = vmatprep.subr.mxu0 0.0
  %163 = vmatpush1.msra.mxu0 0.0
  %164 = vmatprep.subr.mxu0 0.0
  %165 = vmatpush1.msra.mxu0 0.0
  %166 = vmatprep.subr.mxu0 0.0
  %167 = vmatpush1.msra.mxu0 0.0
  %168 = vmatprep.subr.mxu0 0.0
  %169 = vmatpush1.msra.mxu0 0.0
  %170 = vmatprep.subr.mxu0 0.0
  %171 = vmatpush1.msra.mxu0 0.0
  %172 = vmatprep.subr.mxu0 0.0
  %173 = vmatpush1.msra.mxu0 0.0
  %174 = vmatprep.subr.mxu0 0.0
  %175 = vmatpush1.msra.mxu0 0.0
  %176 = vmatprep.subr.mxu0 0.0
  %177 = vmatpush1.msra.mxu0 0.0
  %178 = vmatprep.subr.mxu0 0.0
  %179 = vmatpush1.msra.mxu0 0.0
  %180 = vmatprep.subr.mxu0 0.0
  %181 = vmatpush1.msra.mxu0 0.0
  %182 = vmatprep.subr.mxu0 0.0
  %183 = vmatpush1.msra.mxu0 0.0
  %184 = vmatprep.subr.mxu0 0.0
  %185 = vmatpush1.msra.mxu0 0.0
  %186 = vmatprep.mubr.f32.mxu0 0.0
  %187 = vmatmul.mubr.f32.gmra.mrb[0].mxu0 %v112
  %v188 = vpop.f32.mrb[0].mxu0
  %v189 = vadd.f32 0.0, %v188
  %v190 = vpop.f32.mrb[0].mxu0
  %v191 = vadd.f32 0.0, %v190
  %192 = vdwg.mxu0
  %193 = vmatprep.subr.mxu0 %v120
  %194 = vmatpush1.msra.mxu0 %v118
  %195 = vmatprep.subr.mxu0 0.0
  %196 = vmatpush1.msra.mxu0 0.0
  %197 = vmatprep.subr.mxu0 0.0
  %198 = vmatpush1.msra.mxu0 0.0
  %199 = vmatprep.subr.mxu0 0.0
  %200 = vmatpush1.msra.mxu0 0.0
  %201 = vmatprep.subr.mxu0 0.0
  %202 = vmatpush1.msra.mxu0 0.0
  %203 = vmatprep.subr.mxu0 0.0
  %204 = vmatpush1.msra.mxu0 0.0
  %205 = vmatprep.subr.mxu0 0.0
  %206 = vmatpush1.msra.mxu0 0.0
  %207 = vmatprep.subr.mxu0 0.0
  %208 = vmatpush1.msra.mxu0 0.0
  %209 = vmatprep.subr.mxu0 0.0
  %210 = vmatpush1.msra.mxu0 0.0
  %211 = vmatprep.subr.mxu0 0.0
  %212 = vmatpush1.msra.mxu0 0.0
  %213 = vmatprep.subr.mxu0 0.0
  %214 = vmatpush1.msra.mxu0 0.0
  %215 = vmatprep.subr.mxu0 0.0
  %216 = vmatpush1.msra.mxu0 0.0
  %217 = vmatprep.subr.mxu0 0.0
  %218 = vmatpush1.msra.mxu0 0.0
  %219 = vmatprep.subr.mxu0 0.0
  %220 = vmatpush1.msra.mxu0 0.0
  %221 = vmatprep.subr.mxu0 0.0
  %222 = vmatpush1.msra.mxu0 0.0
  %223 = vmatprep.subr.mxu0 0.0
  %224 = vmatpush1.msra.mxu0 0.0
  %225 = vmatprep.subr.mxu0 0.0
  %226 = vmatpush1.msra.mxu0 0.0
  %227 = vmatprep.subr.mxu0 0.0
  %228 = vmatpush1.msra.mxu0 0.0
  %229 = vmatprep.subr.mxu0 0.0
  %230 = vmatpush1.msra.mxu0 0.0
  %231 = vmatprep.subr.mxu0 0.0
  %232 = vmatpush1.msra.mxu0 0.0
  %233 = vmatprep.subr.mxu0 0.0
  %234 = vmatpush1.msra.mxu0 0.0
  %235 = vmatprep.subr.mxu0 0.0
  %236 = vmatpush1.msra.mxu0 0.0
  %237 = vmatprep.subr.mxu0 0.0
  %238 = vmatpush1.msra.mxu0 0.0
  %239 = vmatprep.subr.mxu0 0.0
  %240 = vmatpush1.msra.mxu0 0.0
  %241 = vmatprep.subr.mxu0 0.0
  %242 = vmatpush1.msra.mxu0 0.0
  %243 = vmatprep.subr.mxu0 0.0
  %244 = vmatpush1.msra.mxu0 0.0
  %245 = vmatprep.subr.mxu0 0.0
  %246 = vmatpush1.msra.mxu0 0.0
  %247 = vmatprep.subr.mxu0 0.0
  %248 = vmatpush1.msra.mxu0 0.0
  %249 = vmatprep.subr.mxu0 0.0
  %250 = vmatpush1.msra.mxu0 0.0
  %251 = vmatprep.subr.mxu0 0.0
  %252 = vmatpush1.msra.mxu0 0.0
  %253 = vmatprep.subr.mxu0 0.0
  %254 = vmatpush1.msra.mxu0 0.0
  %255 = vmatprep.subr.mxu0 0.0
  %256 = vmatpush1.msra.mxu0 0.0
  %257 = vmatprep.mubr.f32.mxu0 0.0
  %258 = vmatmul.mubr.f32.gmra.mrb[0].mxu0 %v112
  %v259 = vpop.f32.mrb[0].mxu0
  %v260 = vadd.f32 0.0, %v259
  %v261 = vpop.f32.mrb[0].mxu0
  %v262 = vadd.f32 0.0, %v261
  %263 = vdwg.mxu0
  %v264 = vsel %vm38, %v189, 0.0
  %v265 = vsel %vm38, %v191, 0.0
  %v266 = vadd.f32 %v264, %v265
  %v267 = vsel %vm38, %v260, 0.0
  %v268 = vadd.f32 %v266, %v267
  %v269 = vsel %vm38, %v262, 0.0
  %v270 = vadd.f32 %v268, %v269
  %271 = vadd.xlane.f32.xlu0 %v270
  %v272 = vpop.xlane.xlu0 %271
  %v273 = vmul.f32 %v272, %v48
  %v274 = vmul.f32 %v189, %v189
  %v275 = vmul.f32 %v191, %v191
  %v276 = vmul.f32 %v260, %v260
  %v277 = vmul.f32 %v262, %v262
  %v278 = vsel %vm38, %v274, 0.0
  %v279 = vsel %vm38, %v275, 0.0
  %v280 = vadd.f32 %v278, %v279
  %v281 = vsel %vm38, %v276, 0.0
  %v282 = vadd.f32 %v280, %v281
  %v283 = vsel %vm38, %v277, 0.0
  %v284 = vadd.f32 %v282, %v283
  %285 = vadd.xlane.f32.xlu0 %v284
  %v286 = vpop.xlane.xlu0 %285
  %v287 = vmul.f32 %v286, %v48
  %v288 = vmul.f32 %v273, %v273
  %v289 = vsub.f32 %v287, %v288
  %v290 = vadd.f32 %v289, 1e-05
  %v291 = vrsqrt.pop %v290
  %v292 = vmul.f32 %v25, %v291
  %v293 = vmul.f32 %v273, %v292
  %v294 = vsub.f32 %v26, %v293
  %296 = vset.pattern.permute.xlu0 0
  %297 = vperm.xlu0 %296, %v292
  %v298 = vpop.permute.xlu0 %297
  %v300 = vmul.f32 %v189, %v298
  %v301 = vmul.f32 %v191, %v298
  %v302 = vmul.f32 %v260, %v298
  %v303 = vmul.f32 %v262, %v298
  %305 = vset.pattern.permute.xlu0 0
  %306 = vperm.xlu0 %305, %v294
  %v307 = vpop.permute.xlu0 %306
  %v309 = vadd.f32 %v300, %v307
  %v310 = vadd.f32 %v301, %v307
  %v311 = vadd.f32 %v302, %v307
  %v312 = vadd.f32 %v303, %v307
  %v313 = vmax.f32 %v309, 0.0
  %v314 = vmax.f32 %v310, 0.0
  %v315 = vmax.f32 %v311, 0.0
  %v316 = vmax.f32 %v312, 0.0
  %317 = vrot.lane.b32.xlu0 %v313, 17
  %v318 = vpop.permute.xlu0 %317
  %319 = vrot.lane.b32.xlu0 %v314, 17
  %v320 = vpop.permute.xlu0 %319
  %321 = vrot.lane.b32.xlu0 %v315, 17
  %v322 = vpop.permute.xlu0 %321
  %323 = vrot.lane.b32.xlu0 %v316, 17
  %v324 = vpop.permute.xlu0 %323
  %v325 = vlaneseq
  %v326 = vand.u32 %v325, 127
  %vm327 = vcmp.lt.s32.totalorder %v326, 17
  %v328 = vsel %vm327, %v322, %v324
  %v329 = vsel %vm327, %v320, %v322
  %v330 = vsel %vm327, %v318, %v320
  %v331 = vsel %vm327, %v324, %v318
  %v332 = vld [vmem:[%s5] ss:$8 sm:$0xf]
  %v334 = vlaneseq
  %v335 = vshrl.u32 %v334, 7
  %v336 = vsub.s32 0, %v335
  %v337 = vrot.slane %v332, %v336
  %v338 = vlaneseq
  %v339 = vshrl.u32 %v338, 7
  %v340 = vsub.s32 1, %v339
  %v341 = vrot.slane %v332, %v340
  %v342 = vlaneseq
  %v343 = vshrl.u32 %v342, 7
  %v344 = vsub.s32 2, %v343
  %v345 = vrot.slane %v332, %v344
  %v346 = vlaneseq
  %v347 = vshrl.u32 %v346, 7
  %v348 = vsub.s32 3, %v347
  %v349 = vrot.slane %v332, %v348
  %v354 = vmul.f32 %v331, %v337
  %v355 = vmul.f32 %v330, %v341
  %v356 = vmul.f32 %v329, %v345
  %v357 = vmul.f32 %v328, %v349
  %v358 = vld [vmem:[%s2] sm:$0xf]
  %359 = vrot.lane.b32.xlu0 %v313, 16
  %v360 = vpop.permute.xlu0 %359
  %361 = vrot.lane.b32.xlu0 %v314, 16
  %v362 = vpop.permute.xlu0 %361
  %363 = vrot.lane.b32.xlu0 %v315, 16
  %v364 = vpop.permute.xlu0 %363
  %365 = vrot.lane.b32.xlu0 %v316, 16
  %v366 = vpop.permute.xlu0 %365
  %vm367 = vcmp.lt.s32.totalorder %v326, 16
  %v368 = vsel %vm367, %v364, %v366
  %v369 = vsel %vm367, %v362, %v364
  %v370 = vsel %vm367, %v360, %v362
  %v371 = vsel %vm367, %v366, %v360
  %s372 = scalar_lea.vmem %s5, 1
  %v373 = vld [vmem:[%s372] ss:$8 sm:$0xf]
  %v375 = vlaneseq
  %v376 = vshrl.u32 %v375, 7
  %v377 = vsub.s32 0, %v376
  %v378 = vrot.slane %v373, %v377
  %v379 = vlaneseq
  %v380 = vshrl.u32 %v379, 7
  %v381 = vsub.s32 1, %v380
  %v382 = vrot.slane %v373, %v381
  %v383 = vlaneseq
  %v384 = vshrl.u32 %v383, 7
  %v385 = vsub.s32 2, %v384
  %v386 = vrot.slane %v373, %v385
  %v387 = vlaneseq
  %v388 = vshrl.u32 %v387, 7
  %v389 = vsub.s32 3, %v388
  %v390 = vrot.slane %v373, %v389
  %v395 = vmul.f32 %v371, %v378
  %v396 = vmul.f32 %v370, %v382
  %v397 = vmul.f32 %v369, %v386
  %v398 = vmul.f32 %v368, %v390
  %s399 = scalar_lea.vmem %s2, 4
  %v400 = vld [vmem:[%s399] sm:$0xf]
  %v402 = vsel %vm110, %v400, 0
  %v405 = vsel %vm38, %v395, 0
  %v408 = vsel %vm38, %v396, 0
  %v411 = vsel %vm38, %v397, 0
  %v414 = vsel %vm38, %v398, 0
  %416 = vmatprep.subr.mxu0 %v408
  %417 = vmatpush1.msra.mxu0 %v405
  %418 = vmatprep.subr.mxu0 0.0
  %419 = vmatpush1.msra.mxu0 0.0
  %420 = vmatprep.subr.mxu0 0.0
  %421 = vmatpush1.msra.mxu0 0.0
  %422 = vmatprep.subr.mxu0 0.0
  %423 = vmatpush1.msra.mxu0 0.0
  %424 = vmatprep.subr.mxu0 0.0
  %425 = vmatpush1.msra.mxu0 0.0
  %426 = vmatprep.subr.mxu0 0.0
  %427 = vmatpush1.msra.mxu0 0.0
  %428 = vmatprep.subr.mxu0 0.0
  %429 = vmatpush1.msra.mxu0 0.0
  %430 = vmatprep.subr.mxu0 0.0
  %431 = vmatpush1.msra.mxu0 0.0
  %432 = vmatprep.subr.mxu0 0.0
  %433 = vmatpush1.msra.mxu0 0.0
  %434 = vmatprep.subr.mxu0 0.0
  %435 = vmatpush1.msra.mxu0 0.0
  %436 = vmatprep.subr.mxu0 0.0
  %437 = vmatpush1.msra.mxu0 0.0
  %438 = vmatprep.subr.mxu0 0.0
  %439 = vmatpush1.msra.mxu0 0.0
  %440 = vmatprep.subr.mxu0 0.0
  %441 = vmatpush1.msra.mxu0 0.0
  %442 = vmatprep.subr.mxu0 0.0
  %443 = vmatpush1.msra.mxu0 0.0
  %444 = vmatprep.subr.mxu0 0.0
  %445 = vmatpush1.msra.mxu0 0.0
  %446 = vmatprep.subr.mxu0 0.0
  %447 = vmatpush1.msra.mxu0 0.0
  %448 = vmatprep.subr.mxu0 0.0
  %449 = vmatpush1.msra.mxu0 0.0
  %450 = vmatprep.subr.mxu0 0.0
  %451 = vmatpush1.msra.mxu0 0.0
  %452 = vmatprep.subr.mxu0 0.0
  %453 = vmatpush1.msra.mxu0 0.0
  %454 = vmatprep.subr.mxu0 0.0
  %455 = vmatpush1.msra.mxu0 0.0
  %456 = vmatprep.subr.mxu0 0.0
  %457 = vmatpush1.msra.mxu0 0.0
  %458 = vmatprep.subr.mxu0 0.0
  %459 = vmatpush1.msra.mxu0 0.0
  %460 = vmatprep.subr.mxu0 0.0
  %461 = vmatpush1.msra.mxu0 0.0
  %462 = vmatprep.subr.mxu0 0.0
  %463 = vmatpush1.msra.mxu0 0.0
  %464 = vmatprep.subr.mxu0 0.0
  %465 = vmatpush1.msra.mxu0 0.0
  %466 = vmatprep.subr.mxu0 0.0
  %467 = vmatpush1.msra.mxu0 0.0
  %468 = vmatprep.subr.mxu0 0.0
  %469 = vmatpush1.msra.mxu0 0.0
  %470 = vmatprep.subr.mxu0 0.0
  %471 = vmatpush1.msra.mxu0 0.0
  %472 = vmatprep.subr.mxu0 0.0
  %473 = vmatpush1.msra.mxu0 0.0
  %474 = vmatprep.subr.mxu0 0.0
  %475 = vmatpush1.msra.mxu0 0.0
  %476 = vmatprep.subr.mxu0 0.0
  %477 = vmatpush1.msra.mxu0 0.0
  %478 = vmatprep.subr.mxu0 0.0
  %479 = vmatpush1.msra.mxu0 0.0
  %480 = vmatprep.mubr.f32.mxu0 0.0
  %481 = vmatmul.mubr.f32.gmra.mrb[0].mxu0 %v402
  %v482 = vpop.f32.mrb[0].mxu0
  %v483 = vadd.f32 0.0, %v482
  %v484 = vpop.f32.mrb[0].mxu0
  %v485 = vadd.f32 0.0, %v484
  %486 = vdwg.mxu0
  %487 = vmatprep.subr.mxu0 %v414
  %488 = vmatpush1.msra.mxu0 %v411
  %489 = vmatprep.subr.mxu0 0.0
  %490 = vmatpush1.msra.mxu0 0.0
  %491 = vmatprep.subr.mxu0 0.0
  %492 = vmatpush1.msra.mxu0 0.0
  %493 = vmatprep.subr.mxu0 0.0
  %494 = vmatpush1.msra.mxu0 0.0
  %495 = vmatprep.subr.mxu0 0.0
  %496 = vmatpush1.msra.mxu0 0.0
  %497 = vmatprep.subr.mxu0 0.0
  %498 = vmatpush1.msra.mxu0 0.0
  %499 = vmatprep.subr.mxu0 0.0
  %500 = vmatpush1.msra.mxu0 0.0
  %501 = vmatprep.subr.mxu0 0.0
  %502 = vmatpush1.msra.mxu0 0.0
  %503 = vmatprep.subr.mxu0 0.0
  %504 = vmatpush1.msra.mxu0 0.0
  %505 = vmatprep.subr.mxu0 0.0
  %506 = vmatpush1.msra.mxu0 0.0
  %507 = vmatprep.subr.mxu0 0.0
  %508 = vmatpush1.msra.mxu0 0.0
  %509 = vmatprep.subr.mxu0 0.0
  %510 = vmatpush1.msra.mxu0 0.0
  %511 = vmatprep.subr.mxu0 0.0
  %512 = vmatpush1.msra.mxu0 0.0
  %513 = vmatprep.subr.mxu0 0.0
  %514 = vmatpush1.msra.mxu0 0.0
  %515 = vmatprep.subr.mxu0 0.0
  %516 = vmatpush1.msra.mxu0 0.0
  %517 = vmatprep.subr.mxu0 0.0
  %518 = vmatpush1.msra.mxu0 0.0
  %519 = vmatprep.subr.mxu0 0.0
  %520 = vmatpush1.msra.mxu0 0.0
  %521 = vmatprep.subr.mxu0 0.0
  %522 = vmatpush1.msra.mxu0 0.0
  %523 = vmatprep.subr.mxu0 0.0
  %524 = vmatpush1.msra.mxu0 0.0
  %525 = vmatprep.subr.mxu0 0.0
  %526 = vmatpush1.msra.mxu0 0.0
  %527 = vmatprep.subr.mxu0 0.0
  %528 = vmatpush1.msra.mxu0 0.0
  %529 = vmatprep.subr.mxu0 0.0
  %530 = vmatpush1.msra.mxu0 0.0
  %531 = vmatprep.subr.mxu0 0.0
  %532 = vmatpush1.msra.mxu0 0.0
  %533 = vmatprep.subr.mxu0 0.0
  %534 = vmatpush1.msra.mxu0 0.0
  %535 = vmatprep.subr.mxu0 0.0
  %536 = vmatpush1.msra.mxu0 0.0
  %537 = vmatprep.subr.mxu0 0.0
  %538 = vmatpush1.msra.mxu0 0.0
  %539 = vmatprep.subr.mxu0 0.0
  %540 = vmatpush1.msra.mxu0 0.0
  %541 = vmatprep.subr.mxu0 0.0
  %542 = vmatpush1.msra.mxu0 0.0
  %543 = vmatprep.subr.mxu0 0.0
  %544 = vmatpush1.msra.mxu0 0.0
  %545 = vmatprep.subr.mxu0 0.0
  %546 = vmatpush1.msra.mxu0 0.0
  %547 = vmatprep.subr.mxu0 0.0
  %548 = vmatpush1.msra.mxu0 0.0
  %549 = vmatprep.subr.mxu0 0.0
  %550 = vmatpush1.msra.mxu0 0.0
  %551 = vmatprep.mubr.f32.mxu0 0.0
  %552 = vmatmul.mubr.f32.gmra.mrb[0].mxu0 %v402
  %v553 = vpop.f32.mrb[0].mxu0
  %v554 = vadd.f32 0.0, %v553
  %v555 = vpop.f32.mrb[0].mxu0
  %v556 = vadd.f32 0.0, %v555
  %557 = vdwg.mxu0
  %v559 = vsel %vm110, %v358, 0
  %v562 = vsel %vm38, %v354, 0
  %v565 = vsel %vm38, %v355, 0
  %v568 = vsel %vm38, %v356, 0
  %v571 = vsel %vm38, %v357, 0
  %573 = vmatprep.subr.mxu0 %v565
  %574 = vmatpush1.msra.mxu0 %v562
  %575 = vmatprep.subr.mxu0 0.0
  %576 = vmatpush1.msra.mxu0 0.0
  %577 = vmatprep.subr.mxu0 0.0
  %578 = vmatpush1.msra.mxu0 0.0
  %579 = vmatprep.subr.mxu0 0.0
  %580 = vmatpush1.msra.mxu0 0.0
  %581 = vmatprep.subr.mxu0 0.0
  %582 = vmatpush1.msra.mxu0 0.0
  %583 = vmatprep.subr.mxu0 0.0
  %584 = vmatpush1.msra.mxu0 0.0
  %585 = vmatprep.subr.mxu0 0.0
  %586 = vmatpush1.msra.mxu0 0.0
  %587 = vmatprep.subr.mxu0 0.0
  %588 = vmatpush1.msra.mxu0 0.0
  %589 = vmatprep.subr.mxu0 0.0
  %590 = vmatpush1.msra.mxu0 0.0
  %591 = vmatprep.subr.mxu0 0.0
  %592 = vmatpush1.msra.mxu0 0.0
  %593 = vmatprep.subr.mxu0 0.0
  %594 = vmatpush1.msra.mxu0 0.0
  %595 = vmatprep.subr.mxu0 0.0
  %596 = vmatpush1.msra.mxu0 0.0
  %597 = vmatprep.subr.mxu0 0.0
  %598 = vmatpush1.msra.mxu0 0.0
  %599 = vmatprep.subr.mxu0 0.0
  %600 = vmatpush1.msra.mxu0 0.0
  %601 = vmatprep.subr.mxu0 0.0
  %602 = vmatpush1.msra.mxu0 0.0
  %603 = vmatprep.subr.mxu0 0.0
  %604 = vmatpush1.msra.mxu0 0.0
  %605 = vmatprep.subr.mxu0 0.0
  %606 = vmatpush1.msra.mxu0 0.0
  %607 = vmatprep.subr.mxu0 0.0
  %608 = vmatpush1.msra.mxu0 0.0
  %609 = vmatprep.subr.mxu0 0.0
  %610 = vmatpush1.msra.mxu0 0.0
  %611 = vmatprep.subr.mxu0 0.0
  %612 = vmatpush1.msra.mxu0 0.0
  %613 = vmatprep.subr.mxu0 0.0
  %614 = vmatpush1.msra.mxu0 0.0
  %615 = vmatprep.subr.mxu0 0.0
  %616 = vmatpush1.msra.mxu0 0.0
  %617 = vmatprep.subr.mxu0 0.0
  %618 = vmatpush1.msra.mxu0 0.0
  %619 = vmatprep.subr.mxu0 0.0
  %620 = vmatpush1.msra.mxu0 0.0
  %621 = vmatprep.subr.mxu0 0.0
  %622 = vmatpush1.msra.mxu0 0.0
  %623 = vmatprep.subr.mxu0 0.0
  %624 = vmatpush1.msra.mxu0 0.0
  %625 = vmatprep.subr.mxu0 0.0
  %626 = vmatpush1.msra.mxu0 0.0
  %627 = vmatprep.subr.mxu0 0.0
  %628 = vmatpush1.msra.mxu0 0.0
  %629 = vmatprep.subr.mxu0 0.0
  %630 = vmatpush1.msra.mxu0 0.0
  %631 = vmatprep.subr.mxu0 0.0
  %632 = vmatpush1.msra.mxu0 0.0
  %633 = vmatprep.subr.mxu0 0.0
  %634 = vmatpush1.msra.mxu0 0.0
  %635 = vmatprep.subr.mxu0 0.0
  %636 = vmatpush1.msra.mxu0 0.0
  %637 = vmatprep.mubr.f32.mxu0 0.0
  %638 = vmatmul.mubr.f32.gmra.mrb[0].mxu0 %v559
  %v639 = vpop.f32.mrb[0].mxu0
  %v640 = vadd.f32 %v483, %v639
  %v641 = vpop.f32.mrb[0].mxu0
  %v642 = vadd.f32 %v485, %v641
  %643 = vdwg.mxu0
  %644 = vmatprep.subr.mxu0 %v571
  %645 = vmatpush1.msra.mxu0 %v568
  %646 = vmatprep.subr.mxu0 0.0
  %647 = vmatpush1.msra.mxu0 0.0
  %648 = vmatprep.subr.mxu0 0.0
  %649 = vmatpush1.msra.mxu0 0.0
  %650 = vmatprep.subr.mxu0 0.0
  %651 = vmatpush1.msra.mxu0 0.0
  %652 = vmatprep.subr.mxu0 0.0
  %653 = vmatpush1.msra.mxu0 0.0
  %654 = vmatprep.subr.mxu0 0.0
  %655 = vmatpush1.msra.mxu0 0.0
  %656 = vmatprep.subr.mxu0 0.0
  %657 = vmatpush1.msra.mxu0 0.0
  %658 = vmatprep.subr.mxu0 0.0
  %659 = vmatpush1.msra.mxu0 0.0
  %660 = vmatprep.subr.mxu0 0.0
  %661 = vmatpush1.msra.mxu0 0.0
  %662 = vmatprep.subr.mxu0 0.0
  %663 = vmatpush1.msra.mxu0 0.0
  %664 = vmatprep.subr.mxu0 0.0
  %665 = vmatpush1.msra.mxu0 0.0
  %666 = vmatprep.subr.mxu0 0.0
  %667 = vmatpush1.msra.mxu0 0.0
  %668 = vmatprep.subr.mxu0 0.0
  %669 = vmatpush1.msra.mxu0 0.0
  %670 = vmatprep.subr.mxu0 0.0
  %671 = vmatpush1.msra.mxu0 0.0
  %672 = vmatprep.subr.mxu0 0.0
  %673 = vmatpush1.msra.mxu0 0.0
  %674 = vmatprep.subr.mxu0 0.0
  %675 = vmatpush1.msra.mxu0 0.0
  %676 = vmatprep.subr.mxu0 0.0
  %677 = vmatpush1.msra.mxu0 0.0
  %678 = vmatprep.subr.mxu0 0.0
  %679 = vmatpush1.msra.mxu0 0.0
  %680 = vmatprep.subr.mxu0 0.0
  %681 = vmatpush1.msra.mxu0 0.0
  %682 = vmatprep.subr.mxu0 0.0
  %683 = vmatpush1.msra.mxu0 0.0
  %684 = vmatprep.subr.mxu0 0.0
  %685 = vmatpush1.msra.mxu0 0.0
  %686 = vmatprep.subr.mxu0 0.0
  %687 = vmatpush1.msra.mxu0 0.0
  %688 = vmatprep.subr.mxu0 0.0
  %689 = vmatpush1.msra.mxu0 0.0
  %690 = vmatprep.subr.mxu0 0.0
  %691 = vmatpush1.msra.mxu0 0.0
  %692 = vmatprep.subr.mxu0 0.0
  %693 = vmatpush1.msra.mxu0 0.0
  %694 = vmatprep.subr.mxu0 0.0
  %695 = vmatpush1.msra.mxu0 0.0
  %696 = vmatprep.subr.mxu0 0.0
  %697 = vmatpush1.msra.mxu0 0.0
  %698 = vmatprep.subr.mxu0 0.0
  %699 = vmatpush1.msra.mxu0 0.0
  %700 = vmatprep.subr.mxu0 0.0
  %701 = vmatpush1.msra.mxu0 0.0
  %702 = vmatprep.subr.mxu0 0.0
  %703 = vmatpush1.msra.mxu0 0.0
  %704 = vmatprep.subr.mxu0 0.0
  %705 = vmatpush1.msra.mxu0 0.0
  %706 = vmatprep.subr.mxu0 0.0
  %707 = vmatpush1.msra.mxu0 0.0
  %708 = vmatprep.mubr.f32.mxu0 0.0
  %709 = vmatmul.mubr.f32.gmra.mrb[0].mxu0 %v559
  %v710 = vpop.f32.mrb[0].mxu0
  %v711 = vadd.f32 %v554, %v710
  %v712 = vpop.f32.mrb[0].mxu0
  %v713 = vadd.f32 %v556, %v712
  %714 = vdwg.mxu0
  %715 = vrot.lane.b32.xlu0 %v313, 15
  %v716 = vpop.permute.xlu0 %715
  %717 = vrot.lane.b32.xlu0 %v314, 15
  %v718 = vpop.permute.xlu0 %717
  %719 = vrot.lane.b32.xlu0 %v315, 15
  %v720 = vpop.permute.xlu0 %719
  %721 = vrot.lane.b32.xlu0 %v316, 15
  %v722 = vpop.permute.xlu0 %721
  %vm723 = vcmp.lt.s32.totalorder %v326, 15
  %v724 = vsel %vm723, %v720, %v722
  %v725 = vsel %vm723, %v718, %v720
  %v726 = vsel %vm723, %v716, %v718
  %v727 = vsel %vm723, %v722, %v716
  %s728 = scalar_lea.vmem %s5, 2
  %v729 = vld [vmem:[%s728] ss:$8 sm:$0xf]
  %v731 = vlaneseq
  %v732 = vshrl.u32 %v731, 7
  %v733 = vsub.s32 0, %v732
  %v734 = vrot.slane %v729, %v733
  %v735 = vlaneseq
  %v736 = vshrl.u32 %v735, 7
  %v737 = vsub.s32 1, %v736
  %v738 = vrot.slane %v729, %v737
  %v739 = vlaneseq
  %v740 = vshrl.u32 %v739, 7
  %v741 = vsub.s32 2, %v740
  %v742 = vrot.slane %v729, %v741
  %v743 = vlaneseq
  %v744 = vshrl.u32 %v743, 7
  %v745 = vsub.s32 3, %v744
  %v746 = vrot.slane %v729, %v745
  %v751 = vmul.f32 %v727, %v734
  %v752 = vmul.f32 %v726, %v738
  %v753 = vmul.f32 %v725, %v742
  %v754 = vmul.f32 %v724, %v746
  %s755 = scalar_lea.vmem %s2, 8
  %v756 = vld [vmem:[%s755] sm:$0xf]
  %v758 = vsel %vm110, %v756, 0
  %v761 = vsel %vm38, %v751, 0
  %v764 = vsel %vm38, %v752, 0
  %v767 = vsel %vm38, %v753, 0
  %v770 = vsel %vm38, %v754, 0
  %772 = vmatprep.subr.mxu0 %v764
  %773 = vmatpush1.msra.mxu0 %v761
  %774 = vmatprep.subr.mxu0 0.0
  %775 = vmatpush1.msra.mxu0 0.0
  %776 = vmatprep.subr.mxu0 0.0
  %777 = vmatpush1.msra.mxu0 0.0
  %778 = vmatprep.subr.mxu0 0.0
  %779 = vmatpush1.msra.mxu0 0.0
  %780 = vmatprep.subr.mxu0 0.0
  %781 = vmatpush1.msra.mxu0 0.0
  %782 = vmatprep.subr.mxu0 0.0
  %783 = vmatpush1.msra.mxu0 0.0
  %784 = vmatprep.subr.mxu0 0.0
  %785 = vmatpush1.msra.mxu0 0.0
  %786 = vmatprep.subr.mxu0 0.0
  %787 = vmatpush1.msra.mxu0 0.0
  %788 = vmatprep.subr.mxu0 0.0
  %789 = vmatpush1.msra.mxu0 0.0
  %790 = vmatprep.subr.mxu0 0.0
  %791 = vmatpush1.msra.mxu0 0.0
  %792 = vmatprep.subr.mxu0 0.0
  %793 = vmatpush1.msra.mxu0 0.0
  %794 = vmatprep.subr.mxu0 0.0
  %795 = vmatpush1.msra.mxu0 0.0
  %796 = vmatprep.subr.mxu0 0.0
  %797 = vmatpush1.msra.mxu0 0.0
  %798 = vmatprep.subr.mxu0 0.0
  %799 = vmatpush1.msra.mxu0 0.0
  %800 = vmatprep.subr.mxu0 0.0
  %801 = vmatpush1.msra.mxu0 0.0
  %802 = vmatprep.subr.mxu0 0.0
  %803 = vmatpush1.msra.mxu0 0.0
  %804 = vmatprep.subr.mxu0 0.0
  %805 = vmatpush1.msra.mxu0 0.0
  %806 = vmatprep.subr.mxu0 0.0
  %807 = vmatpush1.msra.mxu0 0.0
  %808 = vmatprep.subr.mxu0 0.0
  %809 = vmatpush1.msra.mxu0 0.0
  %810 = vmatprep.subr.mxu0 0.0
  %811 = vmatpush1.msra.mxu0 0.0
  %812 = vmatprep.subr.mxu0 0.0
  %813 = vmatpush1.msra.mxu0 0.0
  %814 = vmatprep.subr.mxu0 0.0
  %815 = vmatpush1.msra.mxu0 0.0
  %816 = vmatprep.subr.mxu0 0.0
  %817 = vmatpush1.msra.mxu0 0.0
  %818 = vmatprep.subr.mxu0 0.0
  %819 = vmatpush1.msra.mxu0 0.0
  %820 = vmatprep.subr.mxu0 0.0
  %821 = vmatpush1.msra.mxu0 0.0
  %822 = vmatprep.subr.mxu0 0.0
  %823 = vmatpush1.msra.mxu0 0.0
  %824 = vmatprep.subr.mxu0 0.0
  %825 = vmatpush1.msra.mxu0 0.0
  %826 = vmatprep.subr.mxu0 0.0
  %827 = vmatpush1.msra.mxu0 0.0
  %828 = vmatprep.subr.mxu0 0.0
  %829 = vmatpush1.msra.mxu0 0.0
  %830 = vmatprep.subr.mxu0 0.0
  %831 = vmatpush1.msra.mxu0 0.0
  %832 = vmatprep.subr.mxu0 0.0
  %833 = vmatpush1.msra.mxu0 0.0
  %834 = vmatprep.subr.mxu0 0.0
  %835 = vmatpush1.msra.mxu0 0.0
  %836 = vmatprep.mubr.f32.mxu0 0.0
  %837 = vmatmul.mubr.f32.gmra.mrb[0].mxu0 %v758
  %v838 = vpop.f32.mrb[0].mxu0
  %v839 = vadd.f32 0.0, %v838
  %v840 = vpop.f32.mrb[0].mxu0
  %v841 = vadd.f32 0.0, %v840
  %842 = vdwg.mxu0
  %843 = vmatprep.subr.mxu0 %v770
  %844 = vmatpush1.msra.mxu0 %v767
  %845 = vmatprep.subr.mxu0 0.0
  %846 = vmatpush1.msra.mxu0 0.0
  %847 = vmatprep.subr.mxu0 0.0
  %848 = vmatpush1.msra.mxu0 0.0
  %849 = vmatprep.subr.mxu0 0.0
  %850 = vmatpush1.msra.mxu0 0.0
  %851 = vmatprep.subr.mxu0 0.0
  %852 = vmatpush1.msra.mxu0 0.0
  %853 = vmatprep.subr.mxu0 0.0
  %854 = vmatpush1.msra.mxu0 0.0
  %855 = vmatprep.subr.mxu0 0.0
  %856 = vmatpush1.msra.mxu0 0.0
  %857 = vmatprep.subr.mxu0 0.0
  %858 = vmatpush1.msra.mxu0 0.0
  %859 = vmatprep.subr.mxu0 0.0
  %860 = vmatpush1.msra.mxu0 0.0
  %861 = vmatprep.subr.mxu0 0.0
  %862 = vmatpush1.msra.mxu0 0.0
  %863 = vmatprep.subr.mxu0 0.0
  %864 = vmatpush1.msra.mxu0 0.0
  %865 = vmatprep.subr.mxu0 0.0
  %866 = vmatpush1.msra.mxu0 0.0
  %867 = vmatprep.subr.mxu0 0.0
  %868 = vmatpush1.msra.mxu0 0.0
  %869 = vmatprep.subr.mxu0 0.0
  %870 = vmatpush1.msra.mxu0 0.0
  %871 = vmatprep.subr.mxu0 0.0
  %872 = vmatpush1.msra.mxu0 0.0
  %873 = vmatprep.subr.mxu0 0.0
  %874 = vmatpush1.msra.mxu0 0.0
  %875 = vmatprep.subr.mxu0 0.0
  %876 = vmatpush1.msra.mxu0 0.0
  %877 = vmatprep.subr.mxu0 0.0
  %878 = vmatpush1.msra.mxu0 0.0
  %879 = vmatprep.subr.mxu0 0.0
  %880 = vmatpush1.msra.mxu0 0.0
  %881 = vmatprep.subr.mxu0 0.0
  %882 = vmatpush1.msra.mxu0 0.0
  %883 = vmatprep.subr.mxu0 0.0
  %884 = vmatpush1.msra.mxu0 0.0
  %885 = vmatprep.subr.mxu0 0.0
  %886 = vmatpush1.msra.mxu0 0.0
  %887 = vmatprep.subr.mxu0 0.0
  %888 = vmatpush1.msra.mxu0 0.0
  %889 = vmatprep.subr.mxu0 0.0
  %890 = vmatpush1.msra.mxu0 0.0
  %891 = vmatprep.subr.mxu0 0.0
  %892 = vmatpush1.msra.mxu0 0.0
  %893 = vmatprep.subr.mxu0 0.0
  %894 = vmatpush1.msra.mxu0 0.0
  %895 = vmatprep.subr.mxu0 0.0
  %896 = vmatpush1.msra.mxu0 0.0
  %897 = vmatprep.subr.mxu0 0.0
  %898 = vmatpush1.msra.mxu0 0.0
  %899 = vmatprep.subr.mxu0 0.0
  %900 = vmatpush1.msra.mxu0 0.0
  %901 = vmatprep.subr.mxu0 0.0
  %902 = vmatpush1.msra.mxu0 0.0
  %903 = vmatprep.subr.mxu0 0.0
  %904 = vmatpush1.msra.mxu0 0.0
  %905 = vmatprep.subr.mxu0 0.0
  %906 = vmatpush1.msra.mxu0 0.0
  %907 = vmatprep.mubr.f32.mxu0 0.0
  %908 = vmatmul.mubr.f32.gmra.mrb[0].mxu0 %v758
  %v909 = vpop.f32.mrb[0].mxu0
  %v910 = vadd.f32 0.0, %v909
  %v911 = vpop.f32.mrb[0].mxu0
  %v912 = vadd.f32 0.0, %v911
  %913 = vdwg.mxu0
  %v914 = vadd.f32 %v640, %v839
  %v915 = vadd.f32 %v642, %v841
  %v916 = vadd.f32 %v711, %v910
  %v917 = vadd.f32 %v713, %v912
  %918 = vrot.lane.b32.xlu0 %v313, 1
  %v919 = vpop.permute.xlu0 %918
  %920 = vrot.lane.b32.xlu0 %v314, 1
  %v921 = vpop.permute.xlu0 %920
  %922 = vrot.lane.b32.xlu0 %v315, 1
  %v923 = vpop.permute.xlu0 %922
  %924 = vrot.lane.b32.xlu0 %v316, 1
  %v925 = vpop.permute.xlu0 %924
  %vm926 = vcmp.lt.s32.totalorder %v326, 1
  %v927 = vsel %vm926, %v923, %v925
  %v928 = vsel %vm926, %v921, %v923
  %v929 = vsel %vm926, %v919, %v921
  %v930 = vsel %vm926, %v925, %v919
  %s931 = scalar_lea.vmem %s5, 3
  %v932 = vld [vmem:[%s931] ss:$8 sm:$0xf]
  %v934 = vlaneseq
  %v935 = vshrl.u32 %v934, 7
  %v936 = vsub.s32 0, %v935
  %v937 = vrot.slane %v932, %v936
  %v938 = vlaneseq
  %v939 = vshrl.u32 %v938, 7
  %v940 = vsub.s32 1, %v939
  %v941 = vrot.slane %v932, %v940
  %v942 = vlaneseq
  %v943 = vshrl.u32 %v942, 7
  %v944 = vsub.s32 2, %v943
  %v945 = vrot.slane %v932, %v944
  %v946 = vlaneseq
  %v947 = vshrl.u32 %v946, 7
  %v948 = vsub.s32 3, %v947
  %v949 = vrot.slane %v932, %v948
  %v954 = vmul.f32 %v930, %v937
  %v955 = vmul.f32 %v929, %v941
  %v956 = vmul.f32 %v928, %v945
  %v957 = vmul.f32 %v927, %v949
  %s958 = scalar_lea.vmem %s2, 12
  %v959 = vld [vmem:[%s958] sm:$0xf]
  %v961 = vsel %vm110, %v959, 0
  %v964 = vsel %vm38, %v954, 0
  %v967 = vsel %vm38, %v955, 0
  %v970 = vsel %vm38, %v956, 0
  %v973 = vsel %vm38, %v957, 0
  %975 = vmatprep.subr.mxu0 %v967
  %976 = vmatpush1.msra.mxu0 %v964
  %977 = vmatprep.subr.mxu0 0.0
  %978 = vmatpush1.msra.mxu0 0.0
  %979 = vmatprep.subr.mxu0 0.0
  %980 = vmatpush1.msra.mxu0 0.0
  %981 = vmatprep.subr.mxu0 0.0
  %982 = vmatpush1.msra.mxu0 0.0
  %983 = vmatprep.subr.mxu0 0.0
  %984 = vmatpush1.msra.mxu0 0.0
  %985 = vmatprep.subr.mxu0 0.0
  %986 = vmatpush1.msra.mxu0 0.0
  %987 = vmatprep.subr.mxu0 0.0
  %988 = vmatpush1.msra.mxu0 0.0
  %989 = vmatprep.subr.mxu0 0.0
  %990 = vmatpush1.msra.mxu0 0.0
  %991 = vmatprep.subr.mxu0 0.0
  %992 = vmatpush1.msra.mxu0 0.0
  %993 = vmatprep.subr.mxu0 0.0
  %994 = vmatpush1.msra.mxu0 0.0
  %995 = vmatprep.subr.mxu0 0.0
  %996 = vmatpush1.msra.mxu0 0.0
  %997 = vmatprep.subr.mxu0 0.0
  %998 = vmatpush1.msra.mxu0 0.0
  %999 = vmatprep.subr.mxu0 0.0
  %1000 = vmatpush1.msra.mxu0 0.0
  %1001 = vmatprep.subr.mxu0 0.0
  %1002 = vmatpush1.msra.mxu0 0.0
  %1003 = vmatprep.subr.mxu0 0.0
  %1004 = vmatpush1.msra.mxu0 0.0
  %1005 = vmatprep.subr.mxu0 0.0
  %1006 = vmatpush1.msra.mxu0 0.0
  %1007 = vmatprep.subr.mxu0 0.0
  %1008 = vmatpush1.msra.mxu0 0.0
  %1009 = vmatprep.subr.mxu0 0.0
  %1010 = vmatpush1.msra.mxu0 0.0
  %1011 = vmatprep.subr.mxu0 0.0
  %1012 = vmatpush1.msra.mxu0 0.0
  %1013 = vmatprep.subr.mxu0 0.0
  %1014 = vmatpush1.msra.mxu0 0.0
  %1015 = vmatprep.subr.mxu0 0.0
  %1016 = vmatpush1.msra.mxu0 0.0
  %1017 = vmatprep.subr.mxu0 0.0
  %1018 = vmatpush1.msra.mxu0 0.0
  %1019 = vmatprep.subr.mxu0 0.0
  %1020 = vmatpush1.msra.mxu0 0.0
  %1021 = vmatprep.subr.mxu0 0.0
  %1022 = vmatpush1.msra.mxu0 0.0
  %1023 = vmatprep.subr.mxu0 0.0
  %1024 = vmatpush1.msra.mxu0 0.0
  %1025 = vmatprep.subr.mxu0 0.0
  %1026 = vmatpush1.msra.mxu0 0.0
  %1027 = vmatprep.subr.mxu0 0.0
  %1028 = vmatpush1.msra.mxu0 0.0
  %1029 = vmatprep.subr.mxu0 0.0
  %1030 = vmatpush1.msra.mxu0 0.0
  %1031 = vmatprep.subr.mxu0 0.0
  %1032 = vmatpush1.msra.mxu0 0.0
  %1033 = vmatprep.subr.mxu0 0.0
  %1034 = vmatpush1.msra.mxu0 0.0
  %1035 = vmatprep.subr.mxu0 0.0
  %1036 = vmatpush1.msra.mxu0 0.0
  %1037 = vmatprep.subr.mxu0 0.0
  %1038 = vmatpush1.msra.mxu0 0.0
  %1039 = vmatprep.mubr.f32.mxu0 0.0
  %1040 = vmatmul.mubr.f32.gmra.mrb[0].mxu0 %v961
  %v1041 = vpop.f32.mrb[0].mxu0
  %v1042 = vadd.f32 0.0, %v1041
  %v1043 = vpop.f32.mrb[0].mxu0
  %v1044 = vadd.f32 0.0, %v1043
  %1045 = vdwg.mxu0
  %1046 = vmatprep.subr.mxu0 %v973
  %1047 = vmatpush1.msra.mxu0 %v970
  %1048 = vmatprep.subr.mxu0 0.0
  %1049 = vmatpush1.msra.mxu0 0.0
  %1050 = vmatprep.subr.mxu0 0.0
  %1051 = vmatpush1.msra.mxu0 0.0
  %1052 = vmatprep.subr.mxu0 0.0
  %1053 = vmatpush1.msra.mxu0 0.0
  %1054 = vmatprep.subr.mxu0 0.0
  %1055 = vmatpush1.msra.mxu0 0.0
  %1056 = vmatprep.subr.mxu0 0.0
  %1057 = vmatpush1.msra.mxu0 0.0
  %1058 = vmatprep.subr.mxu0 0.0
  %1059 = vmatpush1.msra.mxu0 0.0
  %1060 = vmatprep.subr.mxu0 0.0
  %1061 = vmatpush1.msra.mxu0 0.0
  %1062 = vmatprep.subr.mxu0 0.0
  %1063 = vmatpush1.msra.mxu0 0.0
  %1064 = vmatprep.subr.mxu0 0.0
  %1065 = vmatpush1.msra.mxu0 0.0
  %1066 = vmatprep.subr.mxu0 0.0
  %1067 = vmatpush1.msra.mxu0 0.0
  %1068 = vmatprep.subr.mxu0 0.0
  %1069 = vmatpush1.msra.mxu0 0.0
  %1070 = vmatprep.subr.mxu0 0.0
  %1071 = vmatpush1.msra.mxu0 0.0
  %1072 = vmatprep.subr.mxu0 0.0
  %1073 = vmatpush1.msra.mxu0 0.0
  %1074 = vmatprep.subr.mxu0 0.0
  %1075 = vmatpush1.msra.mxu0 0.0
  %1076 = vmatprep.subr.mxu0 0.0
  %1077 = vmatpush1.msra.mxu0 0.0
  %1078 = vmatprep.subr.mxu0 0.0
  %1079 = vmatpush1.msra.mxu0 0.0
  %1080 = vmatprep.subr.mxu0 0.0
  %1081 = vmatpush1.msra.mxu0 0.0
  %1082 = vmatprep.subr.mxu0 0.0
  %1083 = vmatpush1.msra.mxu0 0.0
  %1084 = vmatprep.subr.mxu0 0.0
  %1085 = vmatpush1.msra.mxu0 0.0
  %1086 = vmatprep.subr.mxu0 0.0
  %1087 = vmatpush1.msra.mxu0 0.0
  %1088 = vmatprep.subr.mxu0 0.0
  %1089 = vmatpush1.msra.mxu0 0.0
  %1090 = vmatprep.subr.mxu0 0.0
  %1091 = vmatpush1.msra.mxu0 0.0
  %1092 = vmatprep.subr.mxu0 0.0
  %1093 = vmatpush1.msra.mxu0 0.0
  %1094 = vmatprep.subr.mxu0 0.0
  %1095 = vmatpush1.msra.mxu0 0.0
  %1096 = vmatprep.subr.mxu0 0.0
  %1097 = vmatpush1.msra.mxu0 0.0
  %1098 = vmatprep.subr.mxu0 0.0
  %1099 = vmatpush1.msra.mxu0 0.0
  %1100 = vmatprep.subr.mxu0 0.0
  %1101 = vmatpush1.msra.mxu0 0.0
  %1102 = vmatprep.subr.mxu0 0.0
  %1103 = vmatpush1.msra.mxu0 0.0
  %1104 = vmatprep.subr.mxu0 0.0
  %1105 = vmatpush1.msra.mxu0 0.0
  %1106 = vmatprep.subr.mxu0 0.0
  %1107 = vmatpush1.msra.mxu0 0.0
  %1108 = vmatprep.subr.mxu0 0.0
  %1109 = vmatpush1.msra.mxu0 0.0
  %1110 = vmatprep.mubr.f32.mxu0 0.0
  %1111 = vmatmul.mubr.f32.gmra.mrb[0].mxu0 %v961
  %v1112 = vpop.f32.mrb[0].mxu0
  %v1113 = vadd.f32 0.0, %v1112
  %v1114 = vpop.f32.mrb[0].mxu0
  %v1115 = vadd.f32 0.0, %v1114
  %1116 = vdwg.mxu0
  %v1117 = vadd.f32 %v914, %v1042
  %v1118 = vadd.f32 %v915, %v1044
  %v1119 = vadd.f32 %v916, %v1113
  %v1120 = vadd.f32 %v917, %v1115
  %s1121 = scalar_lea.vmem %s2, 16
  %v1122 = vld [vmem:[%s1121] sm:$0xf]
  %v1124 = vsel %vm110, %v1122, 0
  %v1127 = vsel %vm38, %v313, 0
  %v1130 = vsel %vm38, %v314, 0
  %v1133 = vsel %vm38, %v315, 0
  %v1136 = vsel %vm38, %v316, 0
  %1138 = vmatprep.subr.mxu0 %v1130
  %1139 = vmatpush1.msra.mxu0 %v1127
  %1140 = vmatprep.subr.mxu0 0.0
  %1141 = vmatpush1.msra.mxu0 0.0
  %1142 = vmatprep.subr.mxu0 0.0
  %1143 = vmatpush1.msra.mxu0 0.0
  %1144 = vmatprep.subr.mxu0 0.0
  %1145 = vmatpush1.msra.mxu0 0.0
  %1146 = vmatprep.subr.mxu0 0.0
  %1147 = vmatpush1.msra.mxu0 0.0
  %1148 = vmatprep.subr.mxu0 0.0
  %1149 = vmatpush1.msra.mxu0 0.0
  %1150 = vmatprep.subr.mxu0 0.0
  %1151 = vmatpush1.msra.mxu0 0.0
  %1152 = vmatprep.subr.mxu0 0.0
  %1153 = vmatpush1.msra.mxu0 0.0
  %1154 = vmatprep.subr.mxu0 0.0
  %1155 = vmatpush1.msra.mxu0 0.0
  %1156 = vmatprep.subr.mxu0 0.0
  %1157 = vmatpush1.msra.mxu0 0.0
  %1158 = vmatprep.subr.mxu0 0.0
  %1159 = vmatpush1.msra.mxu0 0.0
  %1160 = vmatprep.subr.mxu0 0.0
  %1161 = vmatpush1.msra.mxu0 0.0
  %1162 = vmatprep.subr.mxu0 0.0
  %1163 = vmatpush1.msra.mxu0 0.0
  %1164 = vmatprep.subr.mxu0 0.0
  %1165 = vmatpush1.msra.mxu0 0.0
  %1166 = vmatprep.subr.mxu0 0.0
  %1167 = vmatpush1.msra.mxu0 0.0
  %1168 = vmatprep.subr.mxu0 0.0
  %1169 = vmatpush1.msra.mxu0 0.0
  %1170 = vmatprep.subr.mxu0 0.0
  %1171 = vmatpush1.msra.mxu0 0.0
  %1172 = vmatprep.subr.mxu0 0.0
  %1173 = vmatpush1.msra.mxu0 0.0
  %1174 = vmatprep.subr.mxu0 0.0
  %1175 = vmatpush1.msra.mxu0 0.0
  %1176 = vmatprep.subr.mxu0 0.0
  %1177 = vmatpush1.msra.mxu0 0.0
  %1178 = vmatprep.subr.mxu0 0.0
  %1179 = vmatpush1.msra.mxu0 0.0
  %1180 = vmatprep.subr.mxu0 0.0
  %1181 = vmatpush1.msra.mxu0 0.0
  %1182 = vmatprep.subr.mxu0 0.0
  %1183 = vmatpush1.msra.mxu0 0.0
  %1184 = vmatprep.subr.mxu0 0.0
  %1185 = vmatpush1.msra.mxu0 0.0
  %1186 = vmatprep.subr.mxu0 0.0
  %1187 = vmatpush1.msra.mxu0 0.0
  %1188 = vmatprep.subr.mxu0 0.0
  %1189 = vmatpush1.msra.mxu0 0.0
  %1190 = vmatprep.subr.mxu0 0.0
  %1191 = vmatpush1.msra.mxu0 0.0
  %1192 = vmatprep.subr.mxu0 0.0
  %1193 = vmatpush1.msra.mxu0 0.0
  %1194 = vmatprep.subr.mxu0 0.0
  %1195 = vmatpush1.msra.mxu0 0.0
  %1196 = vmatprep.subr.mxu0 0.0
  %1197 = vmatpush1.msra.mxu0 0.0
  %1198 = vmatprep.subr.mxu0 0.0
  %1199 = vmatpush1.msra.mxu0 0.0
  %1200 = vmatprep.subr.mxu0 0.0
  %1201 = vmatpush1.msra.mxu0 0.0
  %1202 = vmatprep.mubr.f32.mxu0 0.0
  %1203 = vmatmul.mubr.f32.gmra.mrb[0].mxu0 %v1124
  %v1204 = vpop.f32.mrb[0].mxu0
  %v1205 = vadd.f32 0.0, %v1204
  %v1206 = vpop.f32.mrb[0].mxu0
  %v1207 = vadd.f32 0.0, %v1206
  %1208 = vdwg.mxu0
  %1209 = vmatprep.subr.mxu0 %v1136
  %1210 = vmatpush1.msra.mxu0 %v1133
  %1211 = vmatprep.subr.mxu0 0.0
  %1212 = vmatpush1.msra.mxu0 0.0
  %1213 = vmatprep.subr.mxu0 0.0
  %1214 = vmatpush1.msra.mxu0 0.0
  %1215 = vmatprep.subr.mxu0 0.0
  %1216 = vmatpush1.msra.mxu0 0.0
  %1217 = vmatprep.subr.mxu0 0.0
  %1218 = vmatpush1.msra.mxu0 0.0
  %1219 = vmatprep.subr.mxu0 0.0
  %1220 = vmatpush1.msra.mxu0 0.0
  %1221 = vmatprep.subr.mxu0 0.0
  %1222 = vmatpush1.msra.mxu0 0.0
  %1223 = vmatprep.subr.mxu0 0.0
  %1224 = vmatpush1.msra.mxu0 0.0
  %1225 = vmatprep.subr.mxu0 0.0
  %1226 = vmatpush1.msra.mxu0 0.0
  %1227 = vmatprep.subr.mxu0 0.0
  %1228 = vmatpush1.msra.mxu0 0.0
  %1229 = vmatprep.subr.mxu0 0.0
  %1230 = vmatpush1.msra.mxu0 0.0
  %1231 = vmatprep.subr.mxu0 0.0
  %1232 = vmatpush1.msra.mxu0 0.0
  %1233 = vmatprep.subr.mxu0 0.0
  %1234 = vmatpush1.msra.mxu0 0.0
  %1235 = vmatprep.subr.mxu0 0.0
  %1236 = vmatpush1.msra.mxu0 0.0
  %1237 = vmatprep.subr.mxu0 0.0
  %1238 = vmatpush1.msra.mxu0 0.0
  %1239 = vmatprep.subr.mxu0 0.0
  %1240 = vmatpush1.msra.mxu0 0.0
  %1241 = vmatprep.subr.mxu0 0.0
  %1242 = vmatpush1.msra.mxu0 0.0
  %1243 = vmatprep.subr.mxu0 0.0
  %1244 = vmatpush1.msra.mxu0 0.0
  %1245 = vmatprep.subr.mxu0 0.0
  %1246 = vmatpush1.msra.mxu0 0.0
  %1247 = vmatprep.subr.mxu0 0.0
  %1248 = vmatpush1.msra.mxu0 0.0
  %1249 = vmatprep.subr.mxu0 0.0
  %1250 = vmatpush1.msra.mxu0 0.0
  %1251 = vmatprep.subr.mxu0 0.0
  %1252 = vmatpush1.msra.mxu0 0.0
  %1253 = vmatprep.subr.mxu0 0.0
  %1254 = vmatpush1.msra.mxu0 0.0
  %1255 = vmatprep.subr.mxu0 0.0
  %1256 = vmatpush1.msra.mxu0 0.0
  %1257 = vmatprep.subr.mxu0 0.0
  %1258 = vmatpush1.msra.mxu0 0.0
  %1259 = vmatprep.subr.mxu0 0.0
  %1260 = vmatpush1.msra.mxu0 0.0
  %1261 = vmatprep.subr.mxu0 0.0
  %1262 = vmatpush1.msra.mxu0 0.0
  %1263 = vmatprep.subr.mxu0 0.0
  %1264 = vmatpush1.msra.mxu0 0.0
  %1265 = vmatprep.subr.mxu0 0.0
  %1266 = vmatpush1.msra.mxu0 0.0
  %1267 = vmatprep.subr.mxu0 0.0
  %1268 = vmatpush1.msra.mxu0 0.0
  %1269 = vmatprep.subr.mxu0 0.0
  %1270 = vmatpush1.msra.mxu0 0.0
  %1271 = vmatprep.subr.mxu0 0.0
  %1272 = vmatpush1.msra.mxu0 0.0
  %1273 = vmatprep.mubr.f32.mxu0 0.0
  %1274 = vmatmul.mubr.f32.gmra.mrb[0].mxu0 %v1124
  %v1275 = vpop.f32.mrb[0].mxu0
  %v1276 = vadd.f32 0.0, %v1275
  %v1277 = vpop.f32.mrb[0].mxu0
  %v1278 = vadd.f32 0.0, %v1277
  %1279 = vdwg.mxu0
  %v1280 = vadd.f32 %v1117, %v1205
  %v1281 = vadd.f32 %v1118, %v1207
  %v1282 = vadd.f32 %v1119, %v1276
  %v1283 = vadd.f32 %v1120, %v1278
  %1284 = vrot.lane.b32.xlu0 %v313, 127
  %v1285 = vpop.permute.xlu0 %1284
  %1286 = vrot.lane.b32.xlu0 %v314, 127
  %v1287 = vpop.permute.xlu0 %1286
  %1288 = vrot.lane.b32.xlu0 %v315, 127
  %v1289 = vpop.permute.xlu0 %1288
  %1290 = vrot.lane.b32.xlu0 %v316, 127
  %v1291 = vpop.permute.xlu0 %1290
  %vm1292 = vcmp.lt.s32.totalorder %v326, 127
  %v1293 = vsel %vm1292, %v1289, %v1291
  %v1294 = vsel %vm1292, %v1287, %v1289
  %v1295 = vsel %vm1292, %v1285, %v1287
  %v1296 = vsel %vm1292, %v1291, %v1285
  %s1297 = scalar_lea.vmem %s5, 5
  %v1298 = vld [vmem:[%s1297] ss:$8 sm:$0xf]
  %v1300 = vlaneseq
  %v1301 = vshrl.u32 %v1300, 7
  %v1302 = vsub.s32 0, %v1301
  %v1303 = vrot.slane %v1298, %v1302
  %v1304 = vlaneseq
  %v1305 = vshrl.u32 %v1304, 7
  %v1306 = vsub.s32 1, %v1305
  %v1307 = vrot.slane %v1298, %v1306
  %v1308 = vlaneseq
  %v1309 = vshrl.u32 %v1308, 7
  %v1310 = vsub.s32 2, %v1309
  %v1311 = vrot.slane %v1298, %v1310
  %v1312 = vlaneseq
  %v1313 = vshrl.u32 %v1312, 7
  %v1314 = vsub.s32 3, %v1313
  %v1315 = vrot.slane %v1298, %v1314
  %v1320 = vmul.f32 %v1295, %v1303
  %v1321 = vmul.f32 %v1294, %v1307
  %v1322 = vmul.f32 %v1293, %v1311
  %v1323 = vmul.f32 %v1296, %v1315
  %s1324 = scalar_lea.vmem %s2, 20
  %v1325 = vld [vmem:[%s1324] sm:$0xf]
  %v1327 = vsel %vm110, %v1325, 0
  %v1330 = vsel %vm38, %v1320, 0
  %v1333 = vsel %vm38, %v1321, 0
  %v1336 = vsel %vm38, %v1322, 0
  %v1339 = vsel %vm38, %v1323, 0
  %1341 = vmatprep.subr.mxu0 %v1333
  %1342 = vmatpush1.msra.mxu0 %v1330
  %1343 = vmatprep.subr.mxu0 0.0
  %1344 = vmatpush1.msra.mxu0 0.0
  %1345 = vmatprep.subr.mxu0 0.0
  %1346 = vmatpush1.msra.mxu0 0.0
  %1347 = vmatprep.subr.mxu0 0.0
  %1348 = vmatpush1.msra.mxu0 0.0
  %1349 = vmatprep.subr.mxu0 0.0
  %1350 = vmatpush1.msra.mxu0 0.0
  %1351 = vmatprep.subr.mxu0 0.0
  %1352 = vmatpush1.msra.mxu0 0.0
  %1353 = vmatprep.subr.mxu0 0.0
  %1354 = vmatpush1.msra.mxu0 0.0
  %1355 = vmatprep.subr.mxu0 0.0
  %1356 = vmatpush1.msra.mxu0 0.0
  %1357 = vmatprep.subr.mxu0 0.0
  %1358 = vmatpush1.msra.mxu0 0.0
  %1359 = vmatprep.subr.mxu0 0.0
  %1360 = vmatpush1.msra.mxu0 0.0
  %1361 = vmatprep.subr.mxu0 0.0
  %1362 = vmatpush1.msra.mxu0 0.0
  %1363 = vmatprep.subr.mxu0 0.0
  %1364 = vmatpush1.msra.mxu0 0.0
  %1365 = vmatprep.subr.mxu0 0.0
  %1366 = vmatpush1.msra.mxu0 0.0
  %1367 = vmatprep.subr.mxu0 0.0
  %1368 = vmatpush1.msra.mxu0 0.0
  %1369 = vmatprep.subr.mxu0 0.0
  %1370 = vmatpush1.msra.mxu0 0.0
  %1371 = vmatprep.subr.mxu0 0.0
  %1372 = vmatpush1.msra.mxu0 0.0
  %1373 = vmatprep.subr.mxu0 0.0
  %1374 = vmatpush1.msra.mxu0 0.0
  %1375 = vmatprep.subr.mxu0 0.0
  %1376 = vmatpush1.msra.mxu0 0.0
  %1377 = vmatprep.subr.mxu0 0.0
  %1378 = vmatpush1.msra.mxu0 0.0
  %1379 = vmatprep.subr.mxu0 0.0
  %1380 = vmatpush1.msra.mxu0 0.0
  %1381 = vmatprep.subr.mxu0 0.0
  %1382 = vmatpush1.msra.mxu0 0.0
  %1383 = vmatprep.subr.mxu0 0.0
  %1384 = vmatpush1.msra.mxu0 0.0
  %1385 = vmatprep.subr.mxu0 0.0
  %1386 = vmatpush1.msra.mxu0 0.0
  %1387 = vmatprep.subr.mxu0 0.0
  %1388 = vmatpush1.msra.mxu0 0.0
  %1389 = vmatprep.subr.mxu0 0.0
  %1390 = vmatpush1.msra.mxu0 0.0
  %1391 = vmatprep.subr.mxu0 0.0
  %1392 = vmatpush1.msra.mxu0 0.0
  %1393 = vmatprep.subr.mxu0 0.0
  %1394 = vmatpush1.msra.mxu0 0.0
  %1395 = vmatprep.subr.mxu0 0.0
  %1396 = vmatpush1.msra.mxu0 0.0
  %1397 = vmatprep.subr.mxu0 0.0
  %1398 = vmatpush1.msra.mxu0 0.0
  %1399 = vmatprep.subr.mxu0 0.0
  %1400 = vmatpush1.msra.mxu0 0.0
  %1401 = vmatprep.subr.mxu0 0.0
  %1402 = vmatpush1.msra.mxu0 0.0
  %1403 = vmatprep.subr.mxu0 0.0
  %1404 = vmatpush1.msra.mxu0 0.0
  %1405 = vmatprep.mubr.f32.mxu0 0.0
  %1406 = vmatmul.mubr.f32.gmra.mrb[0].mxu0 %v1327
  %v1407 = vpop.f32.mrb[0].mxu0
  %v1408 = vadd.f32 0.0, %v1407
  %v1409 = vpop.f32.mrb[0].mxu0
  %v1410 = vadd.f32 0.0, %v1409
  %1411 = vdwg.mxu0
  %1412 = vmatprep.subr.mxu0 %v1339
  %1413 = vmatpush1.msra.mxu0 %v1336
  %1414 = vmatprep.subr.mxu0 0.0
  %1415 = vmatpush1.msra.mxu0 0.0
  %1416 = vmatprep.subr.mxu0 0.0
  %1417 = vmatpush1.msra.mxu0 0.0
  %1418 = vmatprep.subr.mxu0 0.0
  %1419 = vmatpush1.msra.mxu0 0.0
  %1420 = vmatprep.subr.mxu0 0.0
  %1421 = vmatpush1.msra.mxu0 0.0
  %1422 = vmatprep.subr.mxu0 0.0
  %1423 = vmatpush1.msra.mxu0 0.0
  %1424 = vmatprep.subr.mxu0 0.0
  %1425 = vmatpush1.msra.mxu0 0.0
  %1426 = vmatprep.subr.mxu0 0.0
  %1427 = vmatpush1.msra.mxu0 0.0
  %1428 = vmatprep.subr.mxu0 0.0
  %1429 = vmatpush1.msra.mxu0 0.0
  %1430 = vmatprep.subr.mxu0 0.0
  %1431 = vmatpush1.msra.mxu0 0.0
  %1432 = vmatprep.subr.mxu0 0.0
  %1433 = vmatpush1.msra.mxu0 0.0
  %1434 = vmatprep.subr.mxu0 0.0
  %1435 = vmatpush1.msra.mxu0 0.0
  %1436 = vmatprep.subr.mxu0 0.0
  %1437 = vmatpush1.msra.mxu0 0.0
  %1438 = vmatprep.subr.mxu0 0.0
  %1439 = vmatpush1.msra.mxu0 0.0
  %1440 = vmatprep.subr.mxu0 0.0
  %1441 = vmatpush1.msra.mxu0 0.0
  %1442 = vmatprep.subr.mxu0 0.0
  %1443 = vmatpush1.msra.mxu0 0.0
  %1444 = vmatprep.subr.mxu0 0.0
  %1445 = vmatpush1.msra.mxu0 0.0
  %1446 = vmatprep.subr.mxu0 0.0
  %1447 = vmatpush1.msra.mxu0 0.0
  %1448 = vmatprep.subr.mxu0 0.0
  %1449 = vmatpush1.msra.mxu0 0.0
  %1450 = vmatprep.subr.mxu0 0.0
  %1451 = vmatpush1.msra.mxu0 0.0
  %1452 = vmatprep.subr.mxu0 0.0
  %1453 = vmatpush1.msra.mxu0 0.0
  %1454 = vmatprep.subr.mxu0 0.0
  %1455 = vmatpush1.msra.mxu0 0.0
  %1456 = vmatprep.subr.mxu0 0.0
  %1457 = vmatpush1.msra.mxu0 0.0
  %1458 = vmatprep.subr.mxu0 0.0
  %1459 = vmatpush1.msra.mxu0 0.0
  %1460 = vmatprep.subr.mxu0 0.0
  %1461 = vmatpush1.msra.mxu0 0.0
  %1462 = vmatprep.subr.mxu0 0.0
  %1463 = vmatpush1.msra.mxu0 0.0
  %1464 = vmatprep.subr.mxu0 0.0
  %1465 = vmatpush1.msra.mxu0 0.0
  %1466 = vmatprep.subr.mxu0 0.0
  %1467 = vmatpush1.msra.mxu0 0.0
  %1468 = vmatprep.subr.mxu0 0.0
  %1469 = vmatpush1.msra.mxu0 0.0
  %1470 = vmatprep.subr.mxu0 0.0
  %1471 = vmatpush1.msra.mxu0 0.0
  %1472 = vmatprep.subr.mxu0 0.0
  %1473 = vmatpush1.msra.mxu0 0.0
  %1474 = vmatprep.subr.mxu0 0.0
  %1475 = vmatpush1.msra.mxu0 0.0
  %1476 = vmatprep.mubr.f32.mxu0 0.0
  %1477 = vmatmul.mubr.f32.gmra.mrb[0].mxu0 %v1327
  %v1478 = vpop.f32.mrb[0].mxu0
  %v1479 = vadd.f32 0.0, %v1478
  %v1480 = vpop.f32.mrb[0].mxu0
  %v1481 = vadd.f32 0.0, %v1480
  %1482 = vdwg.mxu0
  %v1483 = vadd.f32 %v1280, %v1408
  %v1484 = vadd.f32 %v1281, %v1410
  %v1485 = vadd.f32 %v1282, %v1479
  %v1486 = vadd.f32 %v1283, %v1481
  %1487 = vrot.lane.b32.xlu0 %v313, 113
  %v1488 = vpop.permute.xlu0 %1487
  %1489 = vrot.lane.b32.xlu0 %v314, 113
  %v1490 = vpop.permute.xlu0 %1489
  %1491 = vrot.lane.b32.xlu0 %v315, 113
  %v1492 = vpop.permute.xlu0 %1491
  %1493 = vrot.lane.b32.xlu0 %v316, 113
  %v1494 = vpop.permute.xlu0 %1493
  %vm1495 = vcmp.lt.s32.totalorder %v326, 113
  %v1496 = vsel %vm1495, %v1492, %v1494
  %v1497 = vsel %vm1495, %v1490, %v1492
  %v1498 = vsel %vm1495, %v1488, %v1490
  %v1499 = vsel %vm1495, %v1494, %v1488
  %s1500 = scalar_lea.vmem %s5, 6
  %v1501 = vld [vmem:[%s1500] ss:$8 sm:$0xf]
  %v1503 = vlaneseq
  %v1504 = vshrl.u32 %v1503, 7
  %v1505 = vsub.s32 0, %v1504
  %v1506 = vrot.slane %v1501, %v1505
  %v1507 = vlaneseq
  %v1508 = vshrl.u32 %v1507, 7
  %v1509 = vsub.s32 1, %v1508
  %v1510 = vrot.slane %v1501, %v1509
  %v1511 = vlaneseq
  %v1512 = vshrl.u32 %v1511, 7
  %v1513 = vsub.s32 2, %v1512
  %v1514 = vrot.slane %v1501, %v1513
  %v1515 = vlaneseq
  %v1516 = vshrl.u32 %v1515, 7
  %v1517 = vsub.s32 3, %v1516
  %v1518 = vrot.slane %v1501, %v1517
  %v1523 = vmul.f32 %v1498, %v1506
  %v1524 = vmul.f32 %v1497, %v1510
  %v1525 = vmul.f32 %v1496, %v1514
  %v1526 = vmul.f32 %v1499, %v1518
  %s1527 = scalar_lea.vmem %s2, 24
  %v1528 = vld [vmem:[%s1527] sm:$0xf]
  %v1530 = vsel %vm110, %v1528, 0
  %v1533 = vsel %vm38, %v1523, 0
  %v1536 = vsel %vm38, %v1524, 0
  %v1539 = vsel %vm38, %v1525, 0
  %v1542 = vsel %vm38, %v1526, 0
  %1544 = vmatprep.subr.mxu0 %v1536
  %1545 = vmatpush1.msra.mxu0 %v1533
  %1546 = vmatprep.subr.mxu0 0.0
  %1547 = vmatpush1.msra.mxu0 0.0
  %1548 = vmatprep.subr.mxu0 0.0
  %1549 = vmatpush1.msra.mxu0 0.0
  %1550 = vmatprep.subr.mxu0 0.0
  %1551 = vmatpush1.msra.mxu0 0.0
  %1552 = vmatprep.subr.mxu0 0.0
  %1553 = vmatpush1.msra.mxu0 0.0
  %1554 = vmatprep.subr.mxu0 0.0
  %1555 = vmatpush1.msra.mxu0 0.0
  %1556 = vmatprep.subr.mxu0 0.0
  %1557 = vmatpush1.msra.mxu0 0.0
  %1558 = vmatprep.subr.mxu0 0.0
  %1559 = vmatpush1.msra.mxu0 0.0
  %1560 = vmatprep.subr.mxu0 0.0
  %1561 = vmatpush1.msra.mxu0 0.0
  %1562 = vmatprep.subr.mxu0 0.0
  %1563 = vmatpush1.msra.mxu0 0.0
  %1564 = vmatprep.subr.mxu0 0.0
  %1565 = vmatpush1.msra.mxu0 0.0
  %1566 = vmatprep.subr.mxu0 0.0
  %1567 = vmatpush1.msra.mxu0 0.0
  %1568 = vmatprep.subr.mxu0 0.0
  %1569 = vmatpush1.msra.mxu0 0.0
  %1570 = vmatprep.subr.mxu0 0.0
  %1571 = vmatpush1.msra.mxu0 0.0
  %1572 = vmatprep.subr.mxu0 0.0
  %1573 = vmatpush1.msra.mxu0 0.0
  %1574 = vmatprep.subr.mxu0 0.0
  %1575 = vmatpush1.msra.mxu0 0.0
  %1576 = vmatprep.subr.mxu0 0.0
  %1577 = vmatpush1.msra.mxu0 0.0
  %1578 = vmatprep.subr.mxu0 0.0
  %1579 = vmatpush1.msra.mxu0 0.0
  %1580 = vmatprep.subr.mxu0 0.0
  %1581 = vmatpush1.msra.mxu0 0.0
  %1582 = vmatprep.subr.mxu0 0.0
  %1583 = vmatpush1.msra.mxu0 0.0
  %1584 = vmatprep.subr.mxu0 0.0
  %1585 = vmatpush1.msra.mxu0 0.0
  %1586 = vmatprep.subr.mxu0 0.0
  %1587 = vmatpush1.msra.mxu0 0.0
  %1588 = vmatprep.subr.mxu0 0.0
  %1589 = vmatpush1.msra.mxu0 0.0
  %1590 = vmatprep.subr.mxu0 0.0
  %1591 = vmatpush1.msra.mxu0 0.0
  %1592 = vmatprep.subr.mxu0 0.0
  %1593 = vmatpush1.msra.mxu0 0.0
  %1594 = vmatprep.subr.mxu0 0.0
  %1595 = vmatpush1.msra.mxu0 0.0
  %1596 = vmatprep.subr.mxu0 0.0
  %1597 = vmatpush1.msra.mxu0 0.0
  %1598 = vmatprep.subr.mxu0 0.0
  %1599 = vmatpush1.msra.mxu0 0.0
  %1600 = vmatprep.subr.mxu0 0.0
  %1601 = vmatpush1.msra.mxu0 0.0
  %1602 = vmatprep.subr.mxu0 0.0
  %1603 = vmatpush1.msra.mxu0 0.0
  %1604 = vmatprep.subr.mxu0 0.0
  %1605 = vmatpush1.msra.mxu0 0.0
  %1606 = vmatprep.subr.mxu0 0.0
  %1607 = vmatpush1.msra.mxu0 0.0
  %1608 = vmatprep.mubr.f32.mxu0 0.0
  %1609 = vmatmul.mubr.f32.gmra.mrb[0].mxu0 %v1530
  %v1610 = vpop.f32.mrb[0].mxu0
  %v1611 = vadd.f32 0.0, %v1610
  %v1612 = vpop.f32.mrb[0].mxu0
  %v1613 = vadd.f32 0.0, %v1612
  %1614 = vdwg.mxu0
  %1615 = vmatprep.subr.mxu0 %v1542
  %1616 = vmatpush1.msra.mxu0 %v1539
  %1617 = vmatprep.subr.mxu0 0.0
  %1618 = vmatpush1.msra.mxu0 0.0
  %1619 = vmatprep.subr.mxu0 0.0
  %1620 = vmatpush1.msra.mxu0 0.0
  %1621 = vmatprep.subr.mxu0 0.0
  %1622 = vmatpush1.msra.mxu0 0.0
  %1623 = vmatprep.subr.mxu0 0.0
  %1624 = vmatpush1.msra.mxu0 0.0
  %1625 = vmatprep.subr.mxu0 0.0
  %1626 = vmatpush1.msra.mxu0 0.0
  %1627 = vmatprep.subr.mxu0 0.0
  %1628 = vmatpush1.msra.mxu0 0.0
  %1629 = vmatprep.subr.mxu0 0.0
  %1630 = vmatpush1.msra.mxu0 0.0
  %1631 = vmatprep.subr.mxu0 0.0
  %1632 = vmatpush1.msra.mxu0 0.0
  %1633 = vmatprep.subr.mxu0 0.0
  %1634 = vmatpush1.msra.mxu0 0.0
  %1635 = vmatprep.subr.mxu0 0.0
  %1636 = vmatpush1.msra.mxu0 0.0
  %1637 = vmatprep.subr.mxu0 0.0
  %1638 = vmatpush1.msra.mxu0 0.0
  %1639 = vmatprep.subr.mxu0 0.0
  %1640 = vmatpush1.msra.mxu0 0.0
  %1641 = vmatprep.subr.mxu0 0.0
  %1642 = vmatpush1.msra.mxu0 0.0
  %1643 = vmatprep.subr.mxu0 0.0
  %1644 = vmatpush1.msra.mxu0 0.0
  %1645 = vmatprep.subr.mxu0 0.0
  %1646 = vmatpush1.msra.mxu0 0.0
  %1647 = vmatprep.subr.mxu0 0.0
  %1648 = vmatpush1.msra.mxu0 0.0
  %1649 = vmatprep.subr.mxu0 0.0
  %1650 = vmatpush1.msra.mxu0 0.0
  %1651 = vmatprep.subr.mxu0 0.0
  %1652 = vmatpush1.msra.mxu0 0.0
  %1653 = vmatprep.subr.mxu0 0.0
  %1654 = vmatpush1.msra.mxu0 0.0
  %1655 = vmatprep.subr.mxu0 0.0
  %1656 = vmatpush1.msra.mxu0 0.0
  %1657 = vmatprep.subr.mxu0 0.0
  %1658 = vmatpush1.msra.mxu0 0.0
  %1659 = vmatprep.subr.mxu0 0.0
  %1660 = vmatpush1.msra.mxu0 0.0
  %1661 = vmatprep.subr.mxu0 0.0
  %1662 = vmatpush1.msra.mxu0 0.0
  %1663 = vmatprep.subr.mxu0 0.0
  %1664 = vmatpush1.msra.mxu0 0.0
  %1665 = vmatprep.subr.mxu0 0.0
  %1666 = vmatpush1.msra.mxu0 0.0
  %1667 = vmatprep.subr.mxu0 0.0
  %1668 = vmatpush1.msra.mxu0 0.0
  %1669 = vmatprep.subr.mxu0 0.0
  %1670 = vmatpush1.msra.mxu0 0.0
  %1671 = vmatprep.subr.mxu0 0.0
  %1672 = vmatpush1.msra.mxu0 0.0
  %1673 = vmatprep.subr.mxu0 0.0
  %1674 = vmatpush1.msra.mxu0 0.0
  %1675 = vmatprep.subr.mxu0 0.0
  %1676 = vmatpush1.msra.mxu0 0.0
  %1677 = vmatprep.subr.mxu0 0.0
  %1678 = vmatpush1.msra.mxu0 0.0
  %1679 = vmatprep.mubr.f32.mxu0 0.0
  %1680 = vmatmul.mubr.f32.gmra.mrb[0].mxu0 %v1530
  %v1681 = vpop.f32.mrb[0].mxu0
  %v1682 = vadd.f32 0.0, %v1681
  %v1683 = vpop.f32.mrb[0].mxu0
  %v1684 = vadd.f32 0.0, %v1683
  %1685 = vdwg.mxu0
  %v1686 = vadd.f32 %v1483, %v1611
  %v1687 = vadd.f32 %v1484, %v1613
  %v1688 = vadd.f32 %v1485, %v1682
  %v1689 = vadd.f32 %v1486, %v1684
  %1690 = vrot.lane.b32.xlu0 %v313, 112
  %v1691 = vpop.permute.xlu0 %1690
  %1692 = vrot.lane.b32.xlu0 %v314, 112
  %v1693 = vpop.permute.xlu0 %1692
  %1694 = vrot.lane.b32.xlu0 %v315, 112
  %v1695 = vpop.permute.xlu0 %1694
  %1696 = vrot.lane.b32.xlu0 %v316, 112
  %v1697 = vpop.permute.xlu0 %1696
  %vm1698 = vcmp.lt.s32.totalorder %v326, 112
  %v1699 = vsel %vm1698, %v1695, %v1697
  %v1700 = vsel %vm1698, %v1693, %v1695
  %v1701 = vsel %vm1698, %v1691, %v1693
  %v1702 = vsel %vm1698, %v1697, %v1691
  %s1703 = scalar_lea.vmem %s5, 7
  %v1704 = vld [vmem:[%s1703] ss:$8 sm:$0xf]
  %v1706 = vlaneseq
  %v1707 = vshrl.u32 %v1706, 7
  %v1708 = vsub.s32 0, %v1707
  %v1709 = vrot.slane %v1704, %v1708
  %v1710 = vlaneseq
  %v1711 = vshrl.u32 %v1710, 7
  %v1712 = vsub.s32 1, %v1711
  %v1713 = vrot.slane %v1704, %v1712
  %v1714 = vlaneseq
  %v1715 = vshrl.u32 %v1714, 7
  %v1716 = vsub.s32 2, %v1715
  %v1717 = vrot.slane %v1704, %v1716
  %v1718 = vlaneseq
  %v1719 = vshrl.u32 %v1718, 7
  %v1720 = vsub.s32 3, %v1719
  %v1721 = vrot.slane %v1704, %v1720
  %v1726 = vmul.f32 %v1701, %v1709
  %v1727 = vmul.f32 %v1700, %v1713
  %v1728 = vmul.f32 %v1699, %v1717
  %v1729 = vmul.f32 %v1702, %v1721
  %s1730 = scalar_lea.vmem %s2, 28
  %v1731 = vld [vmem:[%s1730] sm:$0xf]
  %v1733 = vsel %vm110, %v1731, 0
  %v1736 = vsel %vm38, %v1726, 0
  %v1739 = vsel %vm38, %v1727, 0
  %v1742 = vsel %vm38, %v1728, 0
  %v1745 = vsel %vm38, %v1729, 0
  %1747 = vmatprep.subr.mxu0 %v1739
  %1748 = vmatpush1.msra.mxu0 %v1736
  %1749 = vmatprep.subr.mxu0 0.0
  %1750 = vmatpush1.msra.mxu0 0.0
  %1751 = vmatprep.subr.mxu0 0.0
  %1752 = vmatpush1.msra.mxu0 0.0
  %1753 = vmatprep.subr.mxu0 0.0
  %1754 = vmatpush1.msra.mxu0 0.0
  %1755 = vmatprep.subr.mxu0 0.0
  %1756 = vmatpush1.msra.mxu0 0.0
  %1757 = vmatprep.subr.mxu0 0.0
  %1758 = vmatpush1.msra.mxu0 0.0
  %1759 = vmatprep.subr.mxu0 0.0
  %1760 = vmatpush1.msra.mxu0 0.0
  %1761 = vmatprep.subr.mxu0 0.0
  %1762 = vmatpush1.msra.mxu0 0.0
  %1763 = vmatprep.subr.mxu0 0.0
  %1764 = vmatpush1.msra.mxu0 0.0
  %1765 = vmatprep.subr.mxu0 0.0
  %1766 = vmatpush1.msra.mxu0 0.0
  %1767 = vmatprep.subr.mxu0 0.0
  %1768 = vmatpush1.msra.mxu0 0.0
  %1769 = vmatprep.subr.mxu0 0.0
  %1770 = vmatpush1.msra.mxu0 0.0
  %1771 = vmatprep.subr.mxu0 0.0
  %1772 = vmatpush1.msra.mxu0 0.0
  %1773 = vmatprep.subr.mxu0 0.0
  %1774 = vmatpush1.msra.mxu0 0.0
  %1775 = vmatprep.subr.mxu0 0.0
  %1776 = vmatpush1.msra.mxu0 0.0
  %1777 = vmatprep.subr.mxu0 0.0
  %1778 = vmatpush1.msra.mxu0 0.0
  %1779 = vmatprep.subr.mxu0 0.0
  %1780 = vmatpush1.msra.mxu0 0.0
  %1781 = vmatprep.subr.mxu0 0.0
  %1782 = vmatpush1.msra.mxu0 0.0
  %1783 = vmatprep.subr.mxu0 0.0
  %1784 = vmatpush1.msra.mxu0 0.0
  %1785 = vmatprep.subr.mxu0 0.0
  %1786 = vmatpush1.msra.mxu0 0.0
  %1787 = vmatprep.subr.mxu0 0.0
  %1788 = vmatpush1.msra.mxu0 0.0
  %1789 = vmatprep.subr.mxu0 0.0
  %1790 = vmatpush1.msra.mxu0 0.0
  %1791 = vmatprep.subr.mxu0 0.0
  %1792 = vmatpush1.msra.mxu0 0.0
  %1793 = vmatprep.subr.mxu0 0.0
  %1794 = vmatpush1.msra.mxu0 0.0
  %1795 = vmatprep.subr.mxu0 0.0
  %1796 = vmatpush1.msra.mxu0 0.0
  %1797 = vmatprep.subr.mxu0 0.0
  %1798 = vmatpush1.msra.mxu0 0.0
  %1799 = vmatprep.subr.mxu0 0.0
  %1800 = vmatpush1.msra.mxu0 0.0
  %1801 = vmatprep.subr.mxu0 0.0
  %1802 = vmatpush1.msra.mxu0 0.0
  %1803 = vmatprep.subr.mxu0 0.0
  %1804 = vmatpush1.msra.mxu0 0.0
  %1805 = vmatprep.subr.mxu0 0.0
  %1806 = vmatpush1.msra.mxu0 0.0
  %1807 = vmatprep.subr.mxu0 0.0
  %1808 = vmatpush1.msra.mxu0 0.0
  %1809 = vmatprep.subr.mxu0 0.0
  %1810 = vmatpush1.msra.mxu0 0.0
  %1811 = vmatprep.mubr.f32.mxu0 0.0
  %1812 = vmatmul.mubr.f32.gmra.mrb[0].mxu0 %v1733
  %v1813 = vpop.f32.mrb[0].mxu0
  %v1814 = vadd.f32 0.0, %v1813
  %v1815 = vpop.f32.mrb[0].mxu0
  %v1816 = vadd.f32 0.0, %v1815
  %1817 = vdwg.mxu0
  %1818 = vmatprep.subr.mxu0 %v1745
  %1819 = vmatpush1.msra.mxu0 %v1742
  %1820 = vmatprep.subr.mxu0 0.0
  %1821 = vmatpush1.msra.mxu0 0.0
  %1822 = vmatprep.subr.mxu0 0.0
  %1823 = vmatpush1.msra.mxu0 0.0
  %1824 = vmatprep.subr.mxu0 0.0
  %1825 = vmatpush1.msra.mxu0 0.0
  %1826 = vmatprep.subr.mxu0 0.0
  %1827 = vmatpush1.msra.mxu0 0.0
  %1828 = vmatprep.subr.mxu0 0.0
  %1829 = vmatpush1.msra.mxu0 0.0
  %1830 = vmatprep.subr.mxu0 0.0
  %1831 = vmatpush1.msra.mxu0 0.0
  %1832 = vmatprep.subr.mxu0 0.0
  %1833 = vmatpush1.msra.mxu0 0.0
  %1834 = vmatprep.subr.mxu0 0.0
  %1835 = vmatpush1.msra.mxu0 0.0
  %1836 = vmatprep.subr.mxu0 0.0
  %1837 = vmatpush1.msra.mxu0 0.0
  %1838 = vmatprep.subr.mxu0 0.0
  %1839 = vmatpush1.msra.mxu0 0.0
  %1840 = vmatprep.subr.mxu0 0.0
  %1841 = vmatpush1.msra.mxu0 0.0
  %1842 = vmatprep.subr.mxu0 0.0
  %1843 = vmatpush1.msra.mxu0 0.0
  %1844 = vmatprep.subr.mxu0 0.0
  %1845 = vmatpush1.msra.mxu0 0.0
  %1846 = vmatprep.subr.mxu0 0.0
  %1847 = vmatpush1.msra.mxu0 0.0
  %1848 = vmatprep.subr.mxu0 0.0
  %1849 = vmatpush1.msra.mxu0 0.0
  %1850 = vmatprep.subr.mxu0 0.0
  %1851 = vmatpush1.msra.mxu0 0.0
  %1852 = vmatprep.subr.mxu0 0.0
  %1853 = vmatpush1.msra.mxu0 0.0
  %1854 = vmatprep.subr.mxu0 0.0
  %1855 = vmatpush1.msra.mxu0 0.0
  %1856 = vmatprep.subr.mxu0 0.0
  %1857 = vmatpush1.msra.mxu0 0.0
  %1858 = vmatprep.subr.mxu0 0.0
  %1859 = vmatpush1.msra.mxu0 0.0
  %1860 = vmatprep.subr.mxu0 0.0
  %1861 = vmatpush1.msra.mxu0 0.0
  %1862 = vmatprep.subr.mxu0 0.0
  %1863 = vmatpush1.msra.mxu0 0.0
  %1864 = vmatprep.subr.mxu0 0.0
  %1865 = vmatpush1.msra.mxu0 0.0
  %1866 = vmatprep.subr.mxu0 0.0
  %1867 = vmatpush1.msra.mxu0 0.0
  %1868 = vmatprep.subr.mxu0 0.0
  %1869 = vmatpush1.msra.mxu0 0.0
  %1870 = vmatprep.subr.mxu0 0.0
  %1871 = vmatpush1.msra.mxu0 0.0
  %1872 = vmatprep.subr.mxu0 0.0
  %1873 = vmatpush1.msra.mxu0 0.0
  %1874 = vmatprep.subr.mxu0 0.0
  %1875 = vmatpush1.msra.mxu0 0.0
  %1876 = vmatprep.subr.mxu0 0.0
  %1877 = vmatpush1.msra.mxu0 0.0
  %1878 = vmatprep.subr.mxu0 0.0
  %1879 = vmatpush1.msra.mxu0 0.0
  %1880 = vmatprep.subr.mxu0 0.0
  %1881 = vmatpush1.msra.mxu0 0.0
  %1882 = vmatprep.mubr.f32.mxu0 0.0
  %1883 = vmatmul.mubr.f32.gmra.mrb[0].mxu0 %v1733
  %v1884 = vpop.f32.mrb[0].mxu0
  %v1885 = vadd.f32 0.0, %v1884
  %v1886 = vpop.f32.mrb[0].mxu0
  %v1887 = vadd.f32 0.0, %v1886
  %1888 = vdwg.mxu0
  %v1889 = vadd.f32 %v1686, %v1814
  %v1890 = vadd.f32 %v1687, %v1816
  %v1891 = vadd.f32 %v1688, %v1885
  %v1892 = vadd.f32 %v1689, %v1887
  %1893 = vrot.lane.b32.xlu0 %v313, 111
  %v1894 = vpop.permute.xlu0 %1893
  %1895 = vrot.lane.b32.xlu0 %v314, 111
  %v1896 = vpop.permute.xlu0 %1895
  %1897 = vrot.lane.b32.xlu0 %v315, 111
  %v1898 = vpop.permute.xlu0 %1897
  %1899 = vrot.lane.b32.xlu0 %v316, 111
  %v1900 = vpop.permute.xlu0 %1899
  %vm1901 = vcmp.lt.s32.totalorder %v326, 111
  %v1902 = vsel %vm1901, %v1898, %v1900
  %v1903 = vsel %vm1901, %v1896, %v1898
  %v1904 = vsel %vm1901, %v1894, %v1896
  %v1905 = vsel %vm1901, %v1900, %v1894
  %s1906 = scalar_lea.vmem %s5, 32
  %v1907 = vld [vmem:[%s1906] ss:$8 sm:$0xf]
  %v1909 = vlaneseq
  %v1910 = vshrl.u32 %v1909, 7
  %v1911 = vsub.s32 0, %v1910
  %v1912 = vrot.slane %v1907, %v1911
  %v1913 = vlaneseq
  %v1914 = vshrl.u32 %v1913, 7
  %v1915 = vsub.s32 1, %v1914
  %v1916 = vrot.slane %v1907, %v1915
  %v1917 = vlaneseq
  %v1918 = vshrl.u32 %v1917, 7
  %v1919 = vsub.s32 2, %v1918
  %v1920 = vrot.slane %v1907, %v1919
  %v1921 = vlaneseq
  %v1922 = vshrl.u32 %v1921, 7
  %v1923 = vsub.s32 3, %v1922
  %v1924 = vrot.slane %v1907, %v1923
  %v1929 = vmul.f32 %v1904, %v1912
  %v1930 = vmul.f32 %v1903, %v1916
  %v1931 = vmul.f32 %v1902, %v1920
  %v1932 = vmul.f32 %v1905, %v1924
  %s1933 = scalar_lea.vmem %s2, 32
  %v1934 = vld [vmem:[%s1933] sm:$0xf]
  %v1936 = vsel %vm110, %v1934, 0
  %v1939 = vsel %vm38, %v1929, 0
  %v1942 = vsel %vm38, %v1930, 0
  %v1945 = vsel %vm38, %v1931, 0
  %v1948 = vsel %vm38, %v1932, 0
  %1950 = vmatprep.subr.mxu0 %v1942
  %1951 = vmatpush1.msra.mxu0 %v1939
  %1952 = vmatprep.subr.mxu0 0.0
  %1953 = vmatpush1.msra.mxu0 0.0
  %1954 = vmatprep.subr.mxu0 0.0
  %1955 = vmatpush1.msra.mxu0 0.0
  %1956 = vmatprep.subr.mxu0 0.0
  %1957 = vmatpush1.msra.mxu0 0.0
  %1958 = vmatprep.subr.mxu0 0.0
  %1959 = vmatpush1.msra.mxu0 0.0
  %1960 = vmatprep.subr.mxu0 0.0
  %1961 = vmatpush1.msra.mxu0 0.0
  %1962 = vmatprep.subr.mxu0 0.0
  %1963 = vmatpush1.msra.mxu0 0.0
  %1964 = vmatprep.subr.mxu0 0.0
  %1965 = vmatpush1.msra.mxu0 0.0
  %1966 = vmatprep.subr.mxu0 0.0
  %1967 = vmatpush1.msra.mxu0 0.0
  %1968 = vmatprep.subr.mxu0 0.0
  %1969 = vmatpush1.msra.mxu0 0.0
  %1970 = vmatprep.subr.mxu0 0.0
  %1971 = vmatpush1.msra.mxu0 0.0
  %1972 = vmatprep.subr.mxu0 0.0
  %1973 = vmatpush1.msra.mxu0 0.0
  %1974 = vmatprep.subr.mxu0 0.0
  %1975 = vmatpush1.msra.mxu0 0.0
  %1976 = vmatprep.subr.mxu0 0.0
  %1977 = vmatpush1.msra.mxu0 0.0
  %1978 = vmatprep.subr.mxu0 0.0
  %1979 = vmatpush1.msra.mxu0 0.0
  %1980 = vmatprep.subr.mxu0 0.0
  %1981 = vmatpush1.msra.mxu0 0.0
  %1982 = vmatprep.subr.mxu0 0.0
  %1983 = vmatpush1.msra.mxu0 0.0
  %1984 = vmatprep.subr.mxu0 0.0
  %1985 = vmatpush1.msra.mxu0 0.0
  %1986 = vmatprep.subr.mxu0 0.0
  %1987 = vmatpush1.msra.mxu0 0.0
  %1988 = vmatprep.subr.mxu0 0.0
  %1989 = vmatpush1.msra.mxu0 0.0
  %1990 = vmatprep.subr.mxu0 0.0
  %1991 = vmatpush1.msra.mxu0 0.0
  %1992 = vmatprep.subr.mxu0 0.0
  %1993 = vmatpush1.msra.mxu0 0.0
  %1994 = vmatprep.subr.mxu0 0.0
  %1995 = vmatpush1.msra.mxu0 0.0
  %1996 = vmatprep.subr.mxu0 0.0
  %1997 = vmatpush1.msra.mxu0 0.0
  %1998 = vmatprep.subr.mxu0 0.0
  %1999 = vmatpush1.msra.mxu0 0.0
  %2000 = vmatprep.subr.mxu0 0.0
  %2001 = vmatpush1.msra.mxu0 0.0
  %2002 = vmatprep.subr.mxu0 0.0
  %2003 = vmatpush1.msra.mxu0 0.0
  %2004 = vmatprep.subr.mxu0 0.0
  %2005 = vmatpush1.msra.mxu0 0.0
  %2006 = vmatprep.subr.mxu0 0.0
  %2007 = vmatpush1.msra.mxu0 0.0
  %2008 = vmatprep.subr.mxu0 0.0
  %2009 = vmatpush1.msra.mxu0 0.0
  %2010 = vmatprep.subr.mxu0 0.0
  %2011 = vmatpush1.msra.mxu0 0.0
  %2012 = vmatprep.subr.mxu0 0.0
  %2013 = vmatpush1.msra.mxu0 0.0
  %2014 = vmatprep.mubr.f32.mxu0 0.0
  %2015 = vmatmul.mubr.f32.gmra.mrb[0].mxu0 %v1936
  %v2016 = vpop.f32.mrb[0].mxu0
  %v2017 = vadd.f32 0.0, %v2016
  %v2018 = vpop.f32.mrb[0].mxu0
  %v2019 = vadd.f32 0.0, %v2018
  %2020 = vdwg.mxu0
  %2021 = vmatprep.subr.mxu0 %v1948
  %2022 = vmatpush1.msra.mxu0 %v1945
  %2023 = vmatprep.subr.mxu0 0.0
  %2024 = vmatpush1.msra.mxu0 0.0
  %2025 = vmatprep.subr.mxu0 0.0
  %2026 = vmatpush1.msra.mxu0 0.0
  %2027 = vmatprep.subr.mxu0 0.0
  %2028 = vmatpush1.msra.mxu0 0.0
  %2029 = vmatprep.subr.mxu0 0.0
  %2030 = vmatpush1.msra.mxu0 0.0
  %2031 = vmatprep.subr.mxu0 0.0
  %2032 = vmatpush1.msra.mxu0 0.0
  %2033 = vmatprep.subr.mxu0 0.0
  %2034 = vmatpush1.msra.mxu0 0.0
  %2035 = vmatprep.subr.mxu0 0.0
  %2036 = vmatpush1.msra.mxu0 0.0
  %2037 = vmatprep.subr.mxu0 0.0
  %2038 = vmatpush1.msra.mxu0 0.0
  %2039 = vmatprep.subr.mxu0 0.0
  %2040 = vmatpush1.msra.mxu0 0.0
  %2041 = vmatprep.subr.mxu0 0.0
  %2042 = vmatpush1.msra.mxu0 0.0
  %2043 = vmatprep.subr.mxu0 0.0
  %2044 = vmatpush1.msra.mxu0 0.0
  %2045 = vmatprep.subr.mxu0 0.0
  %2046 = vmatpush1.msra.mxu0 0.0
  %2047 = vmatprep.subr.mxu0 0.0
  %2048 = vmatpush1.msra.mxu0 0.0
  %2049 = vmatprep.subr.mxu0 0.0
  %2050 = vmatpush1.msra.mxu0 0.0
  %2051 = vmatprep.subr.mxu0 0.0
  %2052 = vmatpush1.msra.mxu0 0.0
  %2053 = vmatprep.subr.mxu0 0.0
  %2054 = vmatpush1.msra.mxu0 0.0
  %2055 = vmatprep.subr.mxu0 0.0
  %2056 = vmatpush1.msra.mxu0 0.0
  %2057 = vmatprep.subr.mxu0 0.0
  %2058 = vmatpush1.msra.mxu0 0.0
  %2059 = vmatprep.subr.mxu0 0.0
  %2060 = vmatpush1.msra.mxu0 0.0
  %2061 = vmatprep.subr.mxu0 0.0
  %2062 = vmatpush1.msra.mxu0 0.0
  %2063 = vmatprep.subr.mxu0 0.0
  %2064 = vmatpush1.msra.mxu0 0.0
  %2065 = vmatprep.subr.mxu0 0.0
  %2066 = vmatpush1.msra.mxu0 0.0
  %2067 = vmatprep.subr.mxu0 0.0
  %2068 = vmatpush1.msra.mxu0 0.0
  %2069 = vmatprep.subr.mxu0 0.0
  %2070 = vmatpush1.msra.mxu0 0.0
  %2071 = vmatprep.subr.mxu0 0.0
  %2072 = vmatpush1.msra.mxu0 0.0
  %2073 = vmatprep.subr.mxu0 0.0
  %2074 = vmatpush1.msra.mxu0 0.0
  %2075 = vmatprep.subr.mxu0 0.0
  %2076 = vmatpush1.msra.mxu0 0.0
  %2077 = vmatprep.subr.mxu0 0.0
  %2078 = vmatpush1.msra.mxu0 0.0
  %2079 = vmatprep.subr.mxu0 0.0
  %2080 = vmatpush1.msra.mxu0 0.0
  %2081 = vmatprep.subr.mxu0 0.0
  %2082 = vmatpush1.msra.mxu0 0.0
  %2083 = vmatprep.subr.mxu0 0.0
  %2084 = vmatpush1.msra.mxu0 0.0
  %2085 = vmatprep.mubr.f32.mxu0 0.0
  %2086 = vmatmul.mubr.f32.gmra.mrb[0].mxu0 %v1936
  %v2087 = vpop.f32.mrb[0].mxu0
  %v2088 = vadd.f32 0.0, %v2087
  %v2089 = vpop.f32.mrb[0].mxu0
  %v2090 = vadd.f32 0.0, %v2089
  %2091 = vdwg.mxu0
  %v2092 = vadd.f32 %v1889, %v2017
  %v2093 = vadd.f32 %v1890, %v2019
  %v2094 = vadd.f32 %v1891, %v2088
  %v2095 = vadd.f32 %v1892, %v2090
  %v2096 = vsel %vm38, %v2092, 0.0
  %v2097 = vsel %vm38, %v2093, 0.0
  %v2098 = vadd.f32 %v2096, %v2097
  %v2099 = vsel %vm38, %v2094, 0.0
  %v2100 = vadd.f32 %v2098, %v2099
  %v2101 = vsel %vm38, %v2095, 0.0
  %v2102 = vadd.f32 %v2100, %v2101
  %2103 = vadd.xlane.f32.xlu0 %v2102
  %v2104 = vpop.xlane.xlu0 %2103
  %v2105 = vmul.f32 %v2104, %v48
  %v2106 = vmul.f32 %v2092, %v2092
  %v2107 = vmul.f32 %v2093, %v2093
  %v2108 = vmul.f32 %v2094, %v2094
  %v2109 = vmul.f32 %v2095, %v2095
  %v2110 = vsel %vm38, %v2106, 0.0
  %v2111 = vsel %vm38, %v2107, 0.0
  %v2112 = vadd.f32 %v2110, %v2111
  %v2113 = vsel %vm38, %v2108, 0.0
  %v2114 = vadd.f32 %v2112, %v2113
  %v2115 = vsel %vm38, %v2109, 0.0
  %v2116 = vadd.f32 %v2114, %v2115
  %2117 = vadd.xlane.f32.xlu0 %v2116
  %v2118 = vpop.xlane.xlu0 %2117
  %v2119 = vmul.f32 %v2118, %v48
  %v2120 = vmul.f32 %v2105, %v2105
  %v2121 = vsub.f32 %v2119, %v2120
  %v2122 = vadd.f32 %v2121, 1e-05
  %v2123 = vrsqrt.pop %v2122
  %v2124 = vmul.f32 %v27, %v2123
  %v2125 = vmul.f32 %v2105, %v2124
  %v2126 = vsub.f32 %v28, %v2125
  %2128 = vset.pattern.permute.xlu0 0
  %2129 = vperm.xlu0 %2128, %v2124
  %v2130 = vpop.permute.xlu0 %2129
  %v2132 = vmul.f32 %v2092, %v2130
  %v2133 = vmul.f32 %v2093, %v2130
  %v2134 = vmul.f32 %v2094, %v2130
  %v2135 = vmul.f32 %v2095, %v2130
  %2137 = vset.pattern.permute.xlu0 0
  %2138 = vperm.xlu0 %2137, %v2126
  %v2139 = vpop.permute.xlu0 %2138
  %v2141 = vadd.f32 %v2132, %v2139
  %v2142 = vadd.f32 %v2133, %v2139
  %v2143 = vadd.f32 %v2134, %v2139
  %v2144 = vadd.f32 %v2135, %v2139
  %v2145 = vmax.f32 %v2141, 0.0
  %v2146 = vmax.f32 %v2142, 0.0
  %v2147 = vmax.f32 %v2143, 0.0
  %v2148 = vmax.f32 %v2144, 0.0
  %v2149 = vld [vmem:[%s3] sm:$0xff]
  %2151 = vrot.lane.b32.xlu0 %v2149, 124
  %v2152 = vpop.permute.xlu0 %2151
  %v2153 = vsel %vm110, %v2152, 0
  %v2155 = vsel %vm38, %v30, 0
  %v2157 = vsel %vm38, %v34, 0
  %v2159 = vsel %vm38, %v31, 0
  %v2161 = vsel %vm38, %v35, 0
  %2163 = vmatprep.subr.mxu0 %v2157
  %2164 = vmatpush1.msra.mxu0 %v2155
  %2165 = vmatprep.subr.mxu0 0.0
  %2166 = vmatpush1.msra.mxu0 0.0
  %2167 = vmatprep.subr.mxu0 0.0
  %2168 = vmatpush1.msra.mxu0 0.0
  %2169 = vmatprep.subr.mxu0 0.0
  %2170 = vmatpush1.msra.mxu0 0.0
  %2171 = vmatprep.subr.mxu0 0.0
  %2172 = vmatpush1.msra.mxu0 0.0
  %2173 = vmatprep.subr.mxu0 0.0
  %2174 = vmatpush1.msra.mxu0 0.0
  %2175 = vmatprep.subr.mxu0 0.0
  %2176 = vmatpush1.msra.mxu0 0.0
  %2177 = vmatprep.subr.mxu0 0.0
  %2178 = vmatpush1.msra.mxu0 0.0
  %2179 = vmatprep.subr.mxu0 0.0
  %2180 = vmatpush1.msra.mxu0 0.0
  %2181 = vmatprep.subr.mxu0 0.0
  %2182 = vmatpush1.msra.mxu0 0.0
  %2183 = vmatprep.subr.mxu0 0.0
  %2184 = vmatpush1.msra.mxu0 0.0
  %2185 = vmatprep.subr.mxu0 0.0
  %2186 = vmatpush1.msra.mxu0 0.0
  %2187 = vmatprep.subr.mxu0 0.0
  %2188 = vmatpush1.msra.mxu0 0.0
  %2189 = vmatprep.subr.mxu0 0.0
  %2190 = vmatpush1.msra.mxu0 0.0
  %2191 = vmatprep.subr.mxu0 0.0
  %2192 = vmatpush1.msra.mxu0 0.0
  %2193 = vmatprep.subr.mxu0 0.0
  %2194 = vmatpush1.msra.mxu0 0.0
  %2195 = vmatprep.subr.mxu0 0.0
  %2196 = vmatpush1.msra.mxu0 0.0
  %2197 = vmatprep.subr.mxu0 0.0
  %2198 = vmatpush1.msra.mxu0 0.0
  %2199 = vmatprep.subr.mxu0 0.0
  %2200 = vmatpush1.msra.mxu0 0.0
  %2201 = vmatprep.subr.mxu0 0.0
  %2202 = vmatpush1.msra.mxu0 0.0
  %2203 = vmatprep.subr.mxu0 0.0
  %2204 = vmatpush1.msra.mxu0 0.0
  %2205 = vmatprep.subr.mxu0 0.0
  %2206 = vmatpush1.msra.mxu0 0.0
  %2207 = vmatprep.subr.mxu0 0.0
  %2208 = vmatpush1.msra.mxu0 0.0
  %2209 = vmatprep.subr.mxu0 0.0
  %2210 = vmatpush1.msra.mxu0 0.0
  %2211 = vmatprep.subr.mxu0 0.0
  %2212 = vmatpush1.msra.mxu0 0.0
  %2213 = vmatprep.subr.mxu0 0.0
  %2214 = vmatpush1.msra.mxu0 0.0
  %2215 = vmatprep.subr.mxu0 0.0
  %2216 = vmatpush1.msra.mxu0 0.0
  %2217 = vmatprep.subr.mxu0 0.0
  %2218 = vmatpush1.msra.mxu0 0.0
  %2219 = vmatprep.subr.mxu0 0.0
  %2220 = vmatpush1.msra.mxu0 0.0
  %2221 = vmatprep.subr.mxu0 0.0
  %2222 = vmatpush1.msra.mxu0 0.0
  %2223 = vmatprep.subr.mxu0 0.0
  %2224 = vmatpush1.msra.mxu0 0.0
  %2225 = vmatprep.subr.mxu0 0.0
  %2226 = vmatpush1.msra.mxu0 0.0
  %2227 = vmatprep.mubr.f32.mxu0 0.0
  %2228 = vmatmul.mubr.f32.gmra.mrb[0].mxu0 %v2153
  %v2229 = vpop.f32.mrb[0].mxu0
  %v2230 = vadd.f32 0.0, %v2229
  %v2231 = vpop.f32.mrb[0].mxu0
  %v2232 = vadd.f32 0.0, %v2231
  %2233 = vdwg.mxu0
  %2234 = vmatprep.subr.mxu0 %v2161
  %2235 = vmatpush1.msra.mxu0 %v2159
  %2236 = vmatprep.subr.mxu0 0.0
  %2237 = vmatpush1.msra.mxu0 0.0
  %2238 = vmatprep.subr.mxu0 0.0
  %2239 = vmatpush1.msra.mxu0 0.0
  %2240 = vmatprep.subr.mxu0 0.0
  %2241 = vmatpush1.msra.mxu0 0.0
  %2242 = vmatprep.subr.mxu0 0.0
  %2243 = vmatpush1.msra.mxu0 0.0
  %2244 = vmatprep.subr.mxu0 0.0
  %2245 = vmatpush1.msra.mxu0 0.0
  %2246 = vmatprep.subr.mxu0 0.0
  %2247 = vmatpush1.msra.mxu0 0.0
  %2248 = vmatprep.subr.mxu0 0.0
  %2249 = vmatpush1.msra.mxu0 0.0
  %2250 = vmatprep.subr.mxu0 0.0
  %2251 = vmatpush1.msra.mxu0 0.0
  %2252 = vmatprep.subr.mxu0 0.0
  %2253 = vmatpush1.msra.mxu0 0.0
  %2254 = vmatprep.subr.mxu0 0.0
  %2255 = vmatpush1.msra.mxu0 0.0
  %2256 = vmatprep.subr.mxu0 0.0
  %2257 = vmatpush1.msra.mxu0 0.0
  %2258 = vmatprep.subr.mxu0 0.0
  %2259 = vmatpush1.msra.mxu0 0.0
  %2260 = vmatprep.subr.mxu0 0.0
  %2261 = vmatpush1.msra.mxu0 0.0
  %2262 = vmatprep.subr.mxu0 0.0
  %2263 = vmatpush1.msra.mxu0 0.0
  %2264 = vmatprep.subr.mxu0 0.0
  %2265 = vmatpush1.msra.mxu0 0.0
  %2266 = vmatprep.subr.mxu0 0.0
  %2267 = vmatpush1.msra.mxu0 0.0
  %2268 = vmatprep.subr.mxu0 0.0
  %2269 = vmatpush1.msra.mxu0 0.0
  %2270 = vmatprep.subr.mxu0 0.0
  %2271 = vmatpush1.msra.mxu0 0.0
  %2272 = vmatprep.subr.mxu0 0.0
  %2273 = vmatpush1.msra.mxu0 0.0
  %2274 = vmatprep.subr.mxu0 0.0
  %2275 = vmatpush1.msra.mxu0 0.0
  %2276 = vmatprep.subr.mxu0 0.0
  %2277 = vmatpush1.msra.mxu0 0.0
  %2278 = vmatprep.subr.mxu0 0.0
  %2279 = vmatpush1.msra.mxu0 0.0
  %2280 = vmatprep.subr.mxu0 0.0
  %2281 = vmatpush1.msra.mxu0 0.0
  %2282 = vmatprep.subr.mxu0 0.0
  %2283 = vmatpush1.msra.mxu0 0.0
  %2284 = vmatprep.subr.mxu0 0.0
  %2285 = vmatpush1.msra.mxu0 0.0
  %2286 = vmatprep.subr.mxu0 0.0
  %2287 = vmatpush1.msra.mxu0 0.0
  %2288 = vmatprep.subr.mxu0 0.0
  %2289 = vmatpush1.msra.mxu0 0.0
  %2290 = vmatprep.subr.mxu0 0.0
  %2291 = vmatpush1.msra.mxu0 0.0
  %2292 = vmatprep.subr.mxu0 0.0
  %2293 = vmatpush1.msra.mxu0 0.0
  %2294 = vmatprep.subr.mxu0 0.0
  %2295 = vmatpush1.msra.mxu0 0.0
  %2296 = vmatprep.subr.mxu0 0.0
  %2297 = vmatpush1.msra.mxu0 0.0
  %2298 = vmatprep.mubr.f32.mxu0 0.0
  %2299 = vmatmul.mubr.f32.gmra.mrb[0].mxu0 %v2153
  %v2300 = vpop.f32.mrb[0].mxu0
  %v2301 = vadd.f32 0.0, %v2300
  %v2302 = vpop.f32.mrb[0].mxu0
  %v2303 = vadd.f32 0.0, %v2302
  %2304 = vdwg.mxu0
  %v2305 = vsel %vm110, %v2149, 0
  %v2308 = vsel %vm38, %v2145, 0
  %v2311 = vsel %vm38, %v2146, 0
  %v2314 = vsel %vm38, %v2147, 0
  %v2317 = vsel %vm38, %v2148, 0
  %2319 = vmatprep.subr.mxu0 %v2311
  %2320 = vmatpush1.msra.mxu0 %v2308
  %2321 = vmatprep.subr.mxu0 0.0
  %2322 = vmatpush1.msra.mxu0 0.0
  %2323 = vmatprep.subr.mxu0 0.0
  %2324 = vmatpush1.msra.mxu0 0.0
  %2325 = vmatprep.subr.mxu0 0.0
  %2326 = vmatpush1.msra.mxu0 0.0
  %2327 = vmatprep.subr.mxu0 0.0
  %2328 = vmatpush1.msra.mxu0 0.0
  %2329 = vmatprep.subr.mxu0 0.0
  %2330 = vmatpush1.msra.mxu0 0.0
  %2331 = vmatprep.subr.mxu0 0.0
  %2332 = vmatpush1.msra.mxu0 0.0
  %2333 = vmatprep.subr.mxu0 0.0
  %2334 = vmatpush1.msra.mxu0 0.0
  %2335 = vmatprep.subr.mxu0 0.0
  %2336 = vmatpush1.msra.mxu0 0.0
  %2337 = vmatprep.subr.mxu0 0.0
  %2338 = vmatpush1.msra.mxu0 0.0
  %2339 = vmatprep.subr.mxu0 0.0
  %2340 = vmatpush1.msra.mxu0 0.0
  %2341 = vmatprep.subr.mxu0 0.0
  %2342 = vmatpush1.msra.mxu0 0.0
  %2343 = vmatprep.subr.mxu0 0.0
  %2344 = vmatpush1.msra.mxu0 0.0
  %2345 = vmatprep.subr.mxu0 0.0
  %2346 = vmatpush1.msra.mxu0 0.0
  %2347 = vmatprep.subr.mxu0 0.0
  %2348 = vmatpush1.msra.mxu0 0.0
  %2349 = vmatprep.subr.mxu0 0.0
  %2350 = vmatpush1.msra.mxu0 0.0
  %2351 = vmatprep.subr.mxu0 0.0
  %2352 = vmatpush1.msra.mxu0 0.0
  %2353 = vmatprep.subr.mxu0 0.0
  %2354 = vmatpush1.msra.mxu0 0.0
  %2355 = vmatprep.subr.mxu0 0.0
  %2356 = vmatpush1.msra.mxu0 0.0
  %2357 = vmatprep.subr.mxu0 0.0
  %2358 = vmatpush1.msra.mxu0 0.0
  %2359 = vmatprep.subr.mxu0 0.0
  %2360 = vmatpush1.msra.mxu0 0.0
  %2361 = vmatprep.subr.mxu0 0.0
  %2362 = vmatpush1.msra.mxu0 0.0
  %2363 = vmatprep.subr.mxu0 0.0
  %2364 = vmatpush1.msra.mxu0 0.0
  %2365 = vmatprep.subr.mxu0 0.0
  %2366 = vmatpush1.msra.mxu0 0.0
  %2367 = vmatprep.subr.mxu0 0.0
  %2368 = vmatpush1.msra.mxu0 0.0
  %2369 = vmatprep.subr.mxu0 0.0
  %2370 = vmatpush1.msra.mxu0 0.0
  %2371 = vmatprep.subr.mxu0 0.0
  %2372 = vmatpush1.msra.mxu0 0.0
  %2373 = vmatprep.subr.mxu0 0.0
  %2374 = vmatpush1.msra.mxu0 0.0
  %2375 = vmatprep.subr.mxu0 0.0
  %2376 = vmatpush1.msra.mxu0 0.0
  %2377 = vmatprep.subr.mxu0 0.0
  %2378 = vmatpush1.msra.mxu0 0.0
  %2379 = vmatprep.subr.mxu0 0.0
  %2380 = vmatpush1.msra.mxu0 0.0
  %2381 = vmatprep.subr.mxu0 0.0
  %2382 = vmatpush1.msra.mxu0 0.0
  %2383 = vmatprep.mubr.f32.mxu0 0.0
  %2384 = vmatmul.mubr.f32.gmra.mrb[0].mxu0 %v2305
  %v2385 = vpop.f32.mrb[0].mxu0
  %v2386 = vadd.f32 %v2230, %v2385
  %v2387 = vpop.f32.mrb[0].mxu0
  %v2388 = vadd.f32 %v2232, %v2387
  %2389 = vdwg.mxu0
  %2390 = vmatprep.subr.mxu0 %v2317
  %2391 = vmatpush1.msra.mxu0 %v2314
  %2392 = vmatprep.subr.mxu0 0.0
  %2393 = vmatpush1.msra.mxu0 0.0
  %2394 = vmatprep.subr.mxu0 0.0
  %2395 = vmatpush1.msra.mxu0 0.0
  %2396 = vmatprep.subr.mxu0 0.0
  %2397 = vmatpush1.msra.mxu0 0.0
  %2398 = vmatprep.subr.mxu0 0.0
  %2399 = vmatpush1.msra.mxu0 0.0
  %2400 = vmatprep.subr.mxu0 0.0
  %2401 = vmatpush1.msra.mxu0 0.0
  %2402 = vmatprep.subr.mxu0 0.0
  %2403 = vmatpush1.msra.mxu0 0.0
  %2404 = vmatprep.subr.mxu0 0.0
  %2405 = vmatpush1.msra.mxu0 0.0
  %2406 = vmatprep.subr.mxu0 0.0
  %2407 = vmatpush1.msra.mxu0 0.0
  %2408 = vmatprep.subr.mxu0 0.0
  %2409 = vmatpush1.msra.mxu0 0.0
  %2410 = vmatprep.subr.mxu0 0.0
  %2411 = vmatpush1.msra.mxu0 0.0
  %2412 = vmatprep.subr.mxu0 0.0
  %2413 = vmatpush1.msra.mxu0 0.0
  %2414 = vmatprep.subr.mxu0 0.0
  %2415 = vmatpush1.msra.mxu0 0.0
  %2416 = vmatprep.subr.mxu0 0.0
  %2417 = vmatpush1.msra.mxu0 0.0
  %2418 = vmatprep.subr.mxu0 0.0
  %2419 = vmatpush1.msra.mxu0 0.0
  %2420 = vmatprep.subr.mxu0 0.0
  %2421 = vmatpush1.msra.mxu0 0.0
  %2422 = vmatprep.subr.mxu0 0.0
  %2423 = vmatpush1.msra.mxu0 0.0
  %2424 = vmatprep.subr.mxu0 0.0
  %2425 = vmatpush1.msra.mxu0 0.0
  %2426 = vmatprep.subr.mxu0 0.0
  %2427 = vmatpush1.msra.mxu0 0.0
  %2428 = vmatprep.subr.mxu0 0.0
  %2429 = vmatpush1.msra.mxu0 0.0
  %2430 = vmatprep.subr.mxu0 0.0
  %2431 = vmatpush1.msra.mxu0 0.0
  %2432 = vmatprep.subr.mxu0 0.0
  %2433 = vmatpush1.msra.mxu0 0.0
  %2434 = vmatprep.subr.mxu0 0.0
  %2435 = vmatpush1.msra.mxu0 0.0
  %2436 = vmatprep.subr.mxu0 0.0
  %2437 = vmatpush1.msra.mxu0 0.0
  %2438 = vmatprep.subr.mxu0 0.0
  %2439 = vmatpush1.msra.mxu0 0.0
  %2440 = vmatprep.subr.mxu0 0.0
  %2441 = vmatpush1.msra.mxu0 0.0
  %2442 = vmatprep.subr.mxu0 0.0
  %2443 = vmatpush1.msra.mxu0 0.0
  %2444 = vmatprep.subr.mxu0 0.0
  %2445 = vmatpush1.msra.mxu0 0.0
  %2446 = vmatprep.subr.mxu0 0.0
  %2447 = vmatpush1.msra.mxu0 0.0
  %2448 = vmatprep.subr.mxu0 0.0
  %2449 = vmatpush1.msra.mxu0 0.0
  %2450 = vmatprep.subr.mxu0 0.0
  %2451 = vmatpush1.msra.mxu0 0.0
  %2452 = vmatprep.subr.mxu0 0.0
  %2453 = vmatpush1.msra.mxu0 0.0
  %2454 = vmatprep.mubr.f32.mxu0 0.0
  %2455 = vmatmul.mubr.f32.gmra.mrb[0].mxu0 %v2305
  %v2456 = vpop.f32.mrb[0].mxu0
  %v2457 = vadd.f32 %v2301, %v2456
  %v2458 = vpop.f32.mrb[0].mxu0
  %v2459 = vadd.f32 %v2303, %v2458
  %2460 = vdwg.mxu0
  %2462 = vset.pattern.permute.xlu0 0
  %2463 = vperm.xlu0 %2462, %v29
  %v2464 = vpop.permute.xlu0 %2463
  %v2466 = vadd.f32 %v2386, %v2464
  %v2467 = vadd.f32 %v2388, %v2464
  %v2468 = vadd.f32 %v2457, %v2464
  %v2469 = vadd.f32 %v2459, %v2464
  %2470 = vst [vmem:[%s6] sm:$0xff] %v2466
  %2471 = vst [vmem:[%s6 + $0x8] sm:$0xff] %v2467
  %2472 = vst [vmem:[%s6 + $0x10] sm:$0xff] %v2468
  %2473 = vst [vmem:[%s6 + $0x18] sm:$0xff] %v2469
  // Predicated region
  $region26: #{residual_forward.1} parent=0 // pred_check
    _
  $region27: #{residual_forward.1} parent=0 // pred_check_branch
    %2475 = sbr.rel (0) target = $region29
  $region28: #{residual_forward.1} parent=0 // pred_region
    _
  $region29: #{residual_forward.1} parent=0 // pred_fallthru
    _
  // Predicated region
  $region30: #{residual_forward.1} parent=0 // pred_check
    _
  $region31: #{residual_forward.1} parent=0 // pred_check_branch
    %2477 = sbr.rel (0) target = $region33
  $region32: #{residual_forward.1} parent=0 // pred_region
    _
  $region33: #{residual_forward.1} parent=0 // pred_fallthru
    _

</llo_original>
